<compile_context>
chip_gen: v5e
topology: v5e:2x2
jax: 0.10.0
libtpu: 0.0.40
codegen_flags: <defaults>
</compile_context>

<pallas_src>
import jax
import jax.numpy as jnp
from jax.experimental import pallas as pl
from jax.experimental.pallas import tpu as pltpu  # noqa: F401  (TPU backend)

# ----------------------------- configuration ------------------------------
B = 2          # batch
T = 8          # sequence length (batch_first=True)
IN_DIM = 16    # in_dim
HID = 32       # hid_dim
N_LAYERS = 2   # n_layers
DROPOUT = 0.2  # inter-layer dropout; only active in training mode


# ------------------------------- kernel ------------------------------------
def gru_kernel(x_ref,
               wih0_ref, whh0_ref, bih0_ref, bhh0_ref,
               wih1_ref, whh1_ref, bih1_ref, bhh1_ref,
               out_ref, hn_ref):
    H = HID
    f32 = jnp.float32

    # ---------- one-time prologue (off the recurrence critical path) ----------
    # Fold the r/z slabs of the recurrent bias into the input-projection bias.
    bih0 = bih0_ref[...]; bhh0 = bhh0_ref[...]
    bih1 = bih1_ref[...]; bhh1 = bhh1_ref[...]
    bias0 = jnp.concatenate(
        [bih0[:, :2 * H] + bhh0[:, :2 * H], bih0[:, 2 * H:]], axis=1)   # (1, 3H)
    bias1 = jnp.concatenate(
        [bih1[:, :2 * H] + bhh1[:, :2 * H], bih1[:, 2 * H:]], axis=1)   # (1, 3H)
    bhn0 = bhh0[:, 2 * H:]   # (1, H)  n-gate recurrent bias, layer 0
    bhn1 = bhh1[:, 2 * H:]   # (1, H)  n-gate recurrent bias, layer 1

    # Stacked, time-major layer-0 input projection: ONE (T*B, D) @ (D, 3H).
    x_all = x_ref[...].reshape(T * B, IN_DIM)            # row index = t*B + b
    xp0 = jnp.dot(x_all, wih0_ref[...],
                  preferred_element_type=f32) + bias0                   # (T*B, 3H)

    # Fused block-diagonal recurrent weight, built once:
    #   [h0 | h1] (B, 2H) @ W_big (2H, 9H) = [ h0@whh0 | h0@wih1 | h1@whh1 ]
    zpad = jnp.zeros((H, 3 * H), f32)
    w_big = jnp.concatenate(
        [jnp.concatenate([whh0_ref[...], wih1_ref[...], zpad], axis=1),
         jnp.concatenate([zpad, zpad, whh1_ref[...]], axis=1)],
        axis=0)                                                          # (2H, 9H)

    def gates(gx, ghm, bhn, h_prev):
        """gx: input proj. with r/z recurrent bias folded;  ghm: h_prev @ W_hh."""
        r = jax.nn.sigmoid(gx[:, :H] + ghm[:, :H])
        z = jax.nn.sigmoid(gx[:, H:2 * H] + ghm[:, H:2 * H])
        n = jnp.tanh(gx[:, 2 * H:] + r * (ghm[:, 2 * H:] + bhn))
        return (1.0 - z) * n + z * h_prev

    zeros_B3H = jnp.zeros((B, 3 * H), f32)

    # ---------------- wavefront-interleaved recurrence -----------------------
    # Combined step 0: layer-0 t=0 only.  h0_prev == 0 -> skip recurrent matmul.
    h0 = gates(xp0[0:B, :], zeros_B3H, bhn0, jnp.zeros((B, H), f32))
    h1 = jnp.zeros((B, H), f32)

    # Combined steps s = 1..T-1: layer-0 step s and layer-1 step s-1 together.
    # Both consume only the carries from the previous combined step, so each
    # step is one fused matmul + two independent gate blocks.
    for s in range(1, T):                      # static unroll, T is tiny
        lhs = jnp.concatenate([h0, h1], axis=1)                      # (B, 2H)
        big = jnp.dot(lhs, w_big, preferred_element_type=f32)        # (B, 9H)
        h0_new = gates(xp0[s * B:(s + 1) * B, :], big[:, :3 * H], bhn0, h0)
        h1_new = gates(big[:, 3 * H:6 * H] + bias1, big[:, 6 * H:], bhn1, h1)
        out_ref[:, s - 1, :] = h1_new          # store is off the critical path
        h0, h1 = h0_new, h1_new

    # Epilogue: layer-1 step T-1 (consumes layer-0's final hidden h0_{T-1}).
    lhs = jnp.concatenate([h0, h1], axis=1)
    big = jnp.dot(lhs, w_big, preferred_element_type=f32)
    h1 = gates(big[:, 3 * H:6 * H] + bias1, big[:, 6 * H:], bhn1, h1)
    out_ref[:, T - 1, :] = h1

    hn_ref[0] = h0
    hn_ref[1] = h1
    # TODO(synk): inter-layer dropout (p=0.2) applies only in training mode;
    # this kernel implements the eval-mode forward (dropout == identity).


# ------------------------------- wrapper ------------------------------------
def gru_forward(x, wih0, whh0, bih0, bhh0, wih1, whh1, bih1, bhh1):
    """x: (B, T, IN_DIM) f32 -> (out (B, T, HID), h_n (N_LAYERS, B, HID))."""
    x_tm = jnp.transpose(x, (1, 0, 2))   # time-major (T, B, D): layout plumbing only
    return pl.pallas_call(
        gru_kernel,
        out_shape=(jax.ShapeDtypeStruct((B, T, HID), jnp.float32),
                   jax.ShapeDtypeStruct((N_LAYERS, B, HID), jnp.float32)),
        in_specs=[
            pl.BlockSpec((T, B, IN_DIM), lambda: (0, 0, 0)),       # x (time-major)
            pl.BlockSpec((IN_DIM, 3 * HID), lambda: (0, 0)),       # wih0
            pl.BlockSpec((HID, 3 * HID), lambda: (0, 0)),          # whh0
            pl.BlockSpec((1, 3 * HID), lambda: (0, 0)),            # bih0
            pl.BlockSpec((1, 3 * HID), lambda: (0, 0)),            # bhh0
            pl.BlockSpec((HID, 3 * HID), lambda: (0, 0)),          # wih1
            pl.BlockSpec((HID, 3 * HID), lambda: (0, 0)),          # whh1
            pl.BlockSpec((1, 3 * HID), lambda: (0, 0)),            # bih1
            pl.BlockSpec((1, 3 * HID), lambda: (0, 0)),            # bhh1
        ],
        out_specs=(
            pl.BlockSpec((B, T, HID), lambda: (0, 0, 0)),          # out
            pl.BlockSpec((N_LAYERS, B, HID), lambda: (0, 0, 0)),   # h_n
        ),
    )(x_tm, wih0, whh0, bih0, bhh0, wih1, whh1, bih1, bhh1)


# ------------------------- pure-JAX reference ------------------------------
def gru_reference(x, params):
    """params: list of (wih (D,3H), whh (H,3H), bih (1,3H), bhh (1,3H))."""
    H = HID
    inp = x
    h_finals = []
    for (wih, whh, bih, bhh) in params:
        h = jnp.zeros((x.shape[0], H), jnp.float32)
        outs = []
        for t in range(x.shape[1]):
            gx = inp[:, t, :] @ wih + bih
            gh = h @ whh + bhh
            r = jax.nn.sigmoid(gx[:, :H] + gh[:, :H])
            z = jax.nn.sigmoid(gx[:, H:2 * H] + gh[:, H:2 * H])
            n = jnp.tanh(gx[:, 2 * H:] + r * gh[:, 2 * H:])
            h = (1.0 - z) * n + z * h
            outs.append(h)
        inp = jnp.stack(outs, axis=1)
        h_finals.append(h)
    return inp, jnp.stack(h_finals, axis=0)


# --------------------------------- main ------------------------------------
if __name__ == "__main__":
    key = jax.random.PRNGKey(0)
    ks = jax.random.split(key, 9)
    bound = 1.0 / float(jnp.sqrt(HID))   # PyTorch GRU init: U(-1/sqrt(H), 1/sqrt(H))

    def u(k, shape):
        return jax.random.uniform(k, shape, jnp.float32, -bound, bound)

    wih0 = u(ks[0], (IN_DIM, 3 * HID))
    whh0 = u(ks[1], (HID, 3 * HID))
    bih0 = u(ks[2], (1, 3 * HID))
    bhh0 = u(ks[3], (1, 3 * HID))
    wih1 = u(ks[4], (HID, 3 * HID))
    whh1 = u(ks[5], (HID, 3 * HID))
    bih1 = u(ks[6], (1, 3 * HID))
    bhh1 = u(ks[7], (1, 3 * HID))

    x = jax.random.normal(ks[8], (B, T, IN_DIM), jnp.float32)

    out, hn = gru_forward(x, wih0, whh0, bih0, bhh0, wih1, whh1, bih1, bhh1)
    out = jax.block_until_ready(out)
    hn = jax.block_until_ready(hn)

    ref_out, ref_hn = gru_reference(
        x, [(wih0, whh0, bih0, bhh0), (wih1, whh1, bih1, bhh1)])

    assert out.shape == (B, T, HID), out.shape
    assert hn.shape == (N_LAYERS, B, HID), hn.shape
    err_out = float(jnp.max(jnp.abs(out - ref_out)))
    err_hn = float(jnp.max(jnp.abs(hn - ref_hn)))
    if max(err_out, err_hn) > 1e-4:
        raise AssertionError(
            f"mismatch vs reference: out {err_out:.3e}, h_n {err_hn:.3e}")

    print("KERNEL_OK")
</pallas_src>

<mosaic_0001>
module attributes {stable_mosaic.version = 11 : i64} {
  func.func @gru_kernel(%arg0: memref<8x2x16xf32, #tpu.memory_space<vmem>>, %arg1: memref<16x96xf32, #tpu.memory_space<vmem>>, %arg2: memref<32x96xf32, #tpu.memory_space<vmem>>, %arg3: memref<1x96xf32, #tpu.memory_space<vmem>>, %arg4: memref<1x96xf32, #tpu.memory_space<vmem>>, %arg5: memref<32x96xf32, #tpu.memory_space<vmem>>, %arg6: memref<32x96xf32, #tpu.memory_space<vmem>>, %arg7: memref<1x96xf32, #tpu.memory_space<vmem>>, %arg8: memref<1x96xf32, #tpu.memory_space<vmem>>, %arg9: memref<2x8x32xf32, #tpu.memory_space<vmem>>, %arg10: memref<2x2x32xf32, #tpu.memory_space<vmem>>) attributes {dimension_semantics = [], scalar_prefetch = 0 : i64, scratch_operands = 0 : i64, tpu.core_type = #tpu.core_type<tc>} {
    %c0 = arith.constant 0 : index
    %c0_0 = arith.constant 0 : index
    %0 = vector.load %arg3[%c0, %c0_0] : memref<1x96xf32, #tpu.memory_space<vmem>>, vector<1x96xf32>
    %c0_1 = arith.constant 0 : index
    %c0_2 = arith.constant 0 : index
    %1 = vector.load %arg4[%c0_1, %c0_2] : memref<1x96xf32, #tpu.memory_space<vmem>>, vector<1x96xf32>
    %c0_3 = arith.constant 0 : index
    %c0_4 = arith.constant 0 : index
    %2 = vector.load %arg7[%c0_3, %c0_4] : memref<1x96xf32, #tpu.memory_space<vmem>>, vector<1x96xf32>
    %c0_5 = arith.constant 0 : index
    %c0_6 = arith.constant 0 : index
    %3 = vector.load %arg8[%c0_5, %c0_6] : memref<1x96xf32, #tpu.memory_space<vmem>>, vector<1x96xf32>
    %4 = vector.extract_strided_slice %0 {offsets = [0, 0], sizes = [1, 64], strides = [1, 1]} : vector<1x96xf32> to vector<1x64xf32>
    %5 = vector.extract_strided_slice %1 {offsets = [0, 0], sizes = [1, 64], strides = [1, 1]} : vector<1x96xf32> to vector<1x64xf32>
    %6 = arith.addf %4, %5 : vector<1x64xf32>
    %7 = vector.extract_strided_slice %0 {offsets = [0, 64], sizes = [1, 32], strides = [1, 1]} : vector<1x96xf32> to vector<1x32xf32>
    %8 = tpu.concatenate %6, %7 in 1 : vector<1x64xf32>, vector<1x32xf32> -> vector<1x96xf32>
    %9 = vector.extract_strided_slice %2 {offsets = [0, 0], sizes = [1, 64], strides = [1, 1]} : vector<1x96xf32> to vector<1x64xf32>
    %10 = vector.extract_strided_slice %3 {offsets = [0, 0], sizes = [1, 64], strides = [1, 1]} : vector<1x96xf32> to vector<1x64xf32>
    %11 = arith.addf %9, %10 : vector<1x64xf32>
    %12 = vector.extract_strided_slice %2 {offsets = [0, 64], sizes = [1, 32], strides = [1, 1]} : vector<1x96xf32> to vector<1x32xf32>
    %13 = tpu.concatenate %11, %12 in 1 : vector<1x64xf32>, vector<1x32xf32> -> vector<1x96xf32>
    %14 = vector.extract_strided_slice %1 {offsets = [0, 64], sizes = [1, 32], strides = [1, 1]} : vector<1x96xf32> to vector<1x32xf32>
    %15 = vector.extract_strided_slice %3 {offsets = [0, 64], sizes = [1, 32], strides = [1, 1]} : vector<1x96xf32> to vector<1x32xf32>
    %c0_7 = arith.constant 0 : index
    %c0_8 = arith.constant 0 : index
    %c0_9 = arith.constant 0 : index
    %16 = vector.load %arg0[%c0_7, %c0_8, %c0_9] : memref<8x2x16xf32, #tpu.memory_space<vmem>>, vector<8x2x16xf32>
    %17 = vector.shape_cast %16 : vector<8x2x16xf32> to vector<16x16xf32>
    %c0_10 = arith.constant 0 : index
    %c0_11 = arith.constant 0 : index
    %18 = vector.load %arg1[%c0_10, %c0_11] : memref<16x96xf32, #tpu.memory_space<vmem>>, vector<16x96xf32>
    %cst = arith.constant dense<0.000000e+00> : vector<16x96xf32>
    %19 = tpu.matmul %17, %18, %cst {dimension_numbers = #tpu.dot_dimension_numbers<[1], [0], [0], [1], [0, 0, 1, 1], [], []>} : vector<16x16xf32>, vector<16x96xf32>, vector<16x96xf32> -> vector<16x96xf32>
    %20 = vector.broadcast %8 : vector<1x96xf32> to vector<16x96xf32>
    %21 = arith.addf %19, %20 : vector<16x96xf32>
    %cst_12 = arith.constant 0.000000e+00 : f32
    %22 = vector.broadcast %cst_12 : f32 to vector<32x96xf32>
    %c0_13 = arith.constant 0 : index
    %c0_14 = arith.constant 0 : index
    %23 = vector.load %arg2[%c0_13, %c0_14] : memref<32x96xf32, #tpu.memory_space<vmem>>, vector<32x96xf32>
    %c0_15 = arith.constant 0 : index
    %c0_16 = arith.constant 0 : index
    %24 = vector.load %arg5[%c0_15, %c0_16] : memref<32x96xf32, #tpu.memory_space<vmem>>, vector<32x96xf32>
    %25 = tpu.concatenate %23, %24, %22 in 1 : vector<32x96xf32>, vector<32x96xf32>, vector<32x96xf32> -> vector<32x288xf32>
    %c0_17 = arith.constant 0 : index
    %c0_18 = arith.constant 0 : index
    %26 = vector.load %arg6[%c0_17, %c0_18] : memref<32x96xf32, #tpu.memory_space<vmem>>, vector<32x96xf32>
    %27 = tpu.concatenate %22, %22, %26 in 1 : vector<32x96xf32>, vector<32x96xf32>, vector<32x96xf32> -> vector<32x288xf32>
    %28 = tpu.concatenate %25, %27 in 0 : vector<32x288xf32>, vector<32x288xf32> -> vector<64x288xf32>
    %cst_19 = arith.constant 0.000000e+00 : f32
    %29 = vector.broadcast %cst_19 : f32 to vector<2x96xf32>
    %30 = vector.extract_strided_slice %21 {offsets = [0, 0], sizes = [2, 96], strides = [1, 1]} : vector<16x96xf32> to vector<2x96xf32>
    %cst_20 = arith.constant 0.000000e+00 : f32
    %31 = vector.broadcast %cst_20 : f32 to vector<2x32xf32>
    %32 = vector.extract_strided_slice %30 {offsets = [0, 0], sizes = [2, 32], strides = [1, 1]} : vector<2x96xf32> to vector<2x32xf32>
    %33 = vector.extract_strided_slice %29 {offsets = [0, 0], sizes = [2, 32], strides = [1, 1]} : vector<2x96xf32> to vector<2x32xf32>
    %34 = arith.addf %32, %33 : vector<2x32xf32>
    %35 = arith.negf %34 : vector<2x32xf32>
    %36 = math.exp %35 : vector<2x32xf32>
    %cst_21 = arith.constant 1.000000e+00 : f32
    %37 = vector.broadcast %cst_21 : f32 to vector<2x32xf32>
    %38 = arith.addf %37, %36 : vector<2x32xf32>
    %39 = arith.divf %37, %38 : vector<2x32xf32>
    %40 = vector.extract_strided_slice %30 {offsets = [0, 32], sizes = [2, 32], strides = [1, 1]} : vector<2x96xf32> to vector<2x32xf32>
    %41 = vector.extract_strided_slice %29 {offsets = [0, 32], sizes = [2, 32], strides = [1, 1]} : vector<2x96xf32> to vector<2x32xf32>
    %42 = arith.addf %40, %41 : vector<2x32xf32>
    %43 = arith.negf %42 : vector<2x32xf32>
    %44 = math.exp %43 : vector<2x32xf32>
    %cst_22 = arith.constant 1.000000e+00 : f32
    %45 = vector.broadcast %cst_22 : f32 to vector<2x32xf32>
    %46 = arith.addf %45, %44 : vector<2x32xf32>
    %47 = arith.divf %45, %46 : vector<2x32xf32>
    %48 = vector.extract_strided_slice %30 {offsets = [0, 64], sizes = [2, 32], strides = [1, 1]} : vector<2x96xf32> to vector<2x32xf32>
    %49 = vector.extract_strided_slice %29 {offsets = [0, 64], sizes = [2, 32], strides = [1, 1]} : vector<2x96xf32> to vector<2x32xf32>
    %50 = vector.broadcast %14 : vector<1x32xf32> to vector<2x32xf32>
    %51 = arith.addf %49, %50 : vector<2x32xf32>
    %52 = arith.mulf %39, %51 : vector<2x32xf32>
    %53 = arith.addf %48, %52 : vector<2x32xf32>
    %54 = math.tanh %53 : vector<2x32xf32>
    %cst_23 = arith.constant 1.000000e+00 : f32
    %55 = vector.broadcast %cst_23 : f32 to vector<2x32xf32>
    %56 = arith.subf %55, %47 : vector<2x32xf32>
    %57 = arith.mulf %56, %54 : vector<2x32xf32>
    %58 = arith.mulf %47, %31 : vector<2x32xf32>
    %59 = arith.addf %57, %58 : vector<2x32xf32>
    %cst_24 = arith.constant 0.000000e+00 : f32
    %60 = vector.broadcast %cst_24 : f32 to vector<2x32xf32>
    %61 = tpu.concatenate %59, %60 in 1 : vector<2x32xf32>, vector<2x32xf32> -> vector<2x64xf32>
    %cst_25 = arith.constant dense<0.000000e+00> : vector<2x288xf32>
    %62 = tpu.matmul %61, %28, %cst_25 {dimension_numbers = #tpu.dot_dimension_numbers<[1], [0], [0], [1], [0, 0, 1, 1], [], []>} : vector<2x64xf32>, vector<64x288xf32>, vector<2x288xf32> -> vector<2x288xf32>
    %63 = vector.extract_strided_slice %21 {offsets = [2, 0], sizes = [2, 96], strides = [1, 1]} : vector<16x96xf32> to vector<2x96xf32>
    %64 = vector.extract_strided_slice %62 {offsets = [0, 0], sizes = [2, 96], strides = [1, 1]} : vector<2x288xf32> to vector<2x96xf32>
    %65 = vector.extract_strided_slice %63 {offsets = [0, 0], sizes = [2, 32], strides = [1, 1]} : vector<2x96xf32> to vector<2x32xf32>
    %66 = vector.extract_strided_slice %64 {offsets = [0, 0], sizes = [2, 32], strides = [1, 1]} : vector<2x96xf32> to vector<2x32xf32>
    %67 = arith.addf %65, %66 : vector<2x32xf32>
    %68 = arith.negf %67 : vector<2x32xf32>
    %69 = math.exp %68 : vector<2x32xf32>
    %cst_26 = arith.constant 1.000000e+00 : f32
    %70 = vector.broadcast %cst_26 : f32 to vector<2x32xf32>
    %71 = arith.addf %70, %69 : vector<2x32xf32>
    %72 = arith.divf %70, %71 : vector<2x32xf32>
    %73 = vector.extract_strided_slice %63 {offsets = [0, 32], sizes = [2, 32], strides = [1, 1]} : vector<2x96xf32> to vector<2x32xf32>
    %74 = vector.extract_strided_slice %64 {offsets = [0, 32], sizes = [2, 32], strides = [1, 1]} : vector<2x96xf32> to vector<2x32xf32>
    %75 = arith.addf %73, %74 : vector<2x32xf32>
    %76 = arith.negf %75 : vector<2x32xf32>
    %77 = math.exp %76 : vector<2x32xf32>
    %cst_27 = arith.constant 1.000000e+00 : f32
    %78 = vector.broadcast %cst_27 : f32 to vector<2x32xf32>
    %79 = arith.addf %78, %77 : vector<2x32xf32>
    %80 = arith.divf %78, %79 : vector<2x32xf32>
    %81 = vector.extract_strided_slice %63 {offsets = [0, 64], sizes = [2, 32], strides = [1, 1]} : vector<2x96xf32> to vector<2x32xf32>
    %82 = vector.extract_strided_slice %64 {offsets = [0, 64], sizes = [2, 32], strides = [1, 1]} : vector<2x96xf32> to vector<2x32xf32>
    %83 = vector.broadcast %14 : vector<1x32xf32> to vector<2x32xf32>
    %84 = arith.addf %82, %83 : vector<2x32xf32>
    %85 = arith.mulf %72, %84 : vector<2x32xf32>
    %86 = arith.addf %81, %85 : vector<2x32xf32>
    %87 = math.tanh %86 : vector<2x32xf32>
    %cst_28 = arith.constant 1.000000e+00 : f32
    %88 = vector.broadcast %cst_28 : f32 to vector<2x32xf32>
    %89 = arith.subf %88, %80 : vector<2x32xf32>
    %90 = arith.mulf %89, %87 : vector<2x32xf32>
    %91 = arith.mulf %80, %59 : vector<2x32xf32>
    %92 = arith.addf %90, %91 : vector<2x32xf32>
    %93 = vector.extract_strided_slice %62 {offsets = [0, 96], sizes = [2, 96], strides = [1, 1]} : vector<2x288xf32> to vector<2x96xf32>
    %94 = vector.broadcast %13 : vector<1x96xf32> to vector<2x96xf32>
    %95 = arith.addf %93, %94 : vector<2x96xf32>
    %96 = vector.extract_strided_slice %62 {offsets = [0, 192], sizes = [2, 96], strides = [1, 1]} : vector<2x288xf32> to vector<2x96xf32>
    %97 = vector.extract_strided_slice %95 {offsets = [0, 0], sizes = [2, 32], strides = [1, 1]} : vector<2x96xf32> to vector<2x32xf32>
    %98 = vector.extract_strided_slice %96 {offsets = [0, 0], sizes = [2, 32], strides = [1, 1]} : vector<2x96xf32> to vector<2x32xf32>
    %99 = arith.addf %97, %98 : vector<2x32xf32>
    %100 = arith.negf %99 : vector<2x32xf32>
    %101 = math.exp %100 : vector<2x32xf32>
    %cst_29 = arith.constant 1.000000e+00 : f32
    %102 = vector.broadcast %cst_29 : f32 to vector<2x32xf32>
    %103 = arith.addf %102, %101 : vector<2x32xf32>
    %104 = arith.divf %102, %103 : vector<2x32xf32>
    %105 = vector.extract_strided_slice %95 {offsets = [0, 32], sizes = [2, 32], strides = [1, 1]} : vector<2x96xf32> to vector<2x32xf32>
    %106 = vector.extract_strided_slice %96 {offsets = [0, 32], sizes = [2, 32], strides = [1, 1]} : vector<2x96xf32> to vector<2x32xf32>
    %107 = arith.addf %105, %106 : vector<2x32xf32>
    %108 = arith.negf %107 : vector<2x32xf32>
    %109 = math.exp %108 : vector<2x32xf32>
    %cst_30 = arith.constant 1.000000e+00 : f32
    %110 = vector.broadcast %cst_30 : f32 to vector<2x32xf32>
    %111 = arith.addf %110, %109 : vector<2x32xf32>
    %112 = arith.divf %110, %111 : vector<2x32xf32>
    %113 = vector.extract_strided_slice %95 {offsets = [0, 64], sizes = [2, 32], strides = [1, 1]} : vector<2x96xf32> to vector<2x32xf32>
    %114 = vector.extract_strided_slice %96 {offsets = [0, 64], sizes = [2, 32], strides = [1, 1]} : vector<2x96xf32> to vector<2x32xf32>
    %115 = vector.broadcast %15 : vector<1x32xf32> to vector<2x32xf32>
    %116 = arith.addf %114, %115 : vector<2x32xf32>
    %117 = arith.mulf %104, %116 : vector<2x32xf32>
    %118 = arith.addf %113, %117 : vector<2x32xf32>
    %119 = math.tanh %118 : vector<2x32xf32>
    %cst_31 = arith.constant 1.000000e+00 : f32
    %120 = vector.broadcast %cst_31 : f32 to vector<2x32xf32>
    %121 = arith.subf %120, %112 : vector<2x32xf32>
    %122 = arith.mulf %121, %119 : vector<2x32xf32>
    %123 = arith.mulf %112, %60 : vector<2x32xf32>
    %124 = arith.addf %122, %123 : vector<2x32xf32>
    %c0_32 = arith.constant 0 : index
    %c0_33 = arith.constant 0 : index
    %c0_34 = arith.constant 0 : index
    %125 = vector.load %arg9[%c0_32, %c0_33, %c0_34] : memref<2x8x32xf32, #tpu.memory_space<vmem>>, vector<2x1x32xf32>
    %126 = vector.shape_cast %125 : vector<2x1x32xf32> to vector<2x32xf32>
    %127 = vector.shape_cast %124 : vector<2x32xf32> to vector<2x1x32xf32>
    tpu.vector_store %arg9[%c0_32, %c0_33, %c0_34], %127 {strides = array<i32>} : memref<2x8x32xf32, #tpu.memory_space<vmem>>, vector<2x1x32xf32>,
    %128 = tpu.concatenate %92, %124 in 1 : vector<2x32xf32>, vector<2x32xf32> -> vector<2x64xf32>
    %cst_35 = arith.constant dense<0.000000e+00> : vector<2x288xf32>
    %129 = tpu.matmul %128, %28, %cst_35 {dimension_numbers = #tpu.dot_dimension_numbers<[1], [0], [0], [1], [0, 0, 1, 1], [], []>} : vector<2x64xf32>, vector<64x288xf32>, vector<2x288xf32> -> vector<2x288xf32>
    %130 = vector.extract_strided_slice %21 {offsets = [4, 0], sizes = [2, 96], strides = [1, 1]} : vector<16x96xf32> to vector<2x96xf32>
    %131 = vector.extract_strided_slice %129 {offsets = [0, 0], sizes = [2, 96], strides = [1, 1]} : vector<2x288xf32> to vector<2x96xf32>
    %132 = vector.extract_strided_slice %130 {offsets = [0, 0], sizes = [2, 32], strides = [1, 1]} : vector<2x96xf32> to vector<2x32xf32>
    %133 = vector.extract_strided_slice %131 {offsets = [0, 0], sizes = [2, 32], strides = [1, 1]} : vector<2x96xf32> to vector<2x32xf32>
    %134 = arith.addf %132, %133 : vector<2x32xf32>
    %135 = arith.negf %134 : vector<2x32xf32>
    %136 = math.exp %135 : vector<2x32xf32>
    %cst_36 = arith.constant 1.000000e+00 : f32
    %137 = vector.broadcast %cst_36 : f32 to vector<2x32xf32>
    %138 = arith.addf %137, %136 : vector<2x32xf32>
    %139 = arith.divf %137, %138 : vector<2x32xf32>
    %140 = vector.extract_strided_slice %130 {offsets = [0, 32], sizes = [2, 32], strides = [1, 1]} : vector<2x96xf32> to vector<2x32xf32>
    %141 = vector.extract_strided_slice %131 {offsets = [0, 32], sizes = [2, 32], strides = [1, 1]} : vector<2x96xf32> to vector<2x32xf32>
    %142 = arith.addf %140, %141 : vector<2x32xf32>
    %143 = arith.negf %142 : vector<2x32xf32>
    %144 = math.exp %143 : vector<2x32xf32>
    %cst_37 = arith.constant 1.000000e+00 : f32
    %145 = vector.broadcast %cst_37 : f32 to vector<2x32xf32>
    %146 = arith.addf %145, %144 : vector<2x32xf32>
    %147 = arith.divf %145, %146 : vector<2x32xf32>
    %148 = vector.extract_strided_slice %130 {offsets = [0, 64], sizes = [2, 32], strides = [1, 1]} : vector<2x96xf32> to vector<2x32xf32>
    %149 = vector.extract_strided_slice %131 {offsets = [0, 64], sizes = [2, 32], strides = [1, 1]} : vector<2x96xf32> to vector<2x32xf32>
    %150 = vector.broadcast %14 : vector<1x32xf32> to vector<2x32xf32>
    %151 = arith.addf %149, %150 : vector<2x32xf32>
    %152 = arith.mulf %139, %151 : vector<2x32xf32>
    %153 = arith.addf %148, %152 : vector<2x32xf32>
    %154 = math.tanh %153 : vector<2x32xf32>
    %cst_38 = arith.constant 1.000000e+00 : f32
    %155 = vector.broadcast %cst_38 : f32 to vector<2x32xf32>
    %156 = arith.subf %155, %147 : vector<2x32xf32>
    %157 = arith.mulf %156, %154 : vector<2x32xf32>
    %158 = arith.mulf %147, %92 : vector<2x32xf32>
    %159 = arith.addf %157, %158 : vector<2x32xf32>
    %160 = vector.extract_strided_slice %129 {offsets = [0, 96], sizes = [2, 96], strides = [1, 1]} : vector<2x288xf32> to vector<2x96xf32>
    %161 = vector.broadcast %13 : vector<1x96xf32> to vector<2x96xf32>
    %162 = arith.addf %160, %161 : vector<2x96xf32>
    %163 = vector.extract_strided_slice %129 {offsets = [0, 192], sizes = [2, 96], strides = [1, 1]} : vector<2x288xf32> to vector<2x96xf32>
    %164 = vector.extract_strided_slice %162 {offsets = [0, 0], sizes = [2, 32], strides = [1, 1]} : vector<2x96xf32> to vector<2x32xf32>
    %165 = vector.extract_strided_slice %163 {offsets = [0, 0], sizes = [2, 32], strides = [1, 1]} : vector<2x96xf32> to vector<2x32xf32>
    %166 = arith.addf %164, %165 : vector<2x32xf32>
    %167 = arith.negf %166 : vector<2x32xf32>
    %168 = math.exp %167 : vector<2x32xf32>
    %cst_39 = arith.constant 1.000000e+00 : f32
    %169 = vector.broadcast %cst_39 : f32 to vector<2x32xf32>
    %170 = arith.addf %169, %168 : vector<2x32xf32>
    %171 = arith.divf %169, %170 : vector<2x32xf32>
    %172 = vector.extract_strided_slice %162 {offsets = [0, 32], sizes = [2, 32], strides = [1, 1]} : vector<2x96xf32> to vector<2x32xf32>
    %173 = vector.extract_strided_slice %163 {offsets = [0, 32], sizes = [2, 32], strides = [1, 1]} : vector<2x96xf32> to vector<2x32xf32>
    %174 = arith.addf %172, %173 : vector<2x32xf32>
    %175 = arith.negf %174 : vector<2x32xf32>
    %176 = math.exp %175 : vector<2x32xf32>
    %cst_40 = arith.constant 1.000000e+00 : f32
    %177 = vector.broadcast %cst_40 : f32 to vector<2x32xf32>
    %178 = arith.addf %177, %176 : vector<2x32xf32>
    %179 = arith.divf %177, %178 : vector<2x32xf32>
    %180 = vector.extract_strided_slice %162 {offsets = [0, 64], sizes = [2, 32], strides = [1, 1]} : vector<2x96xf32> to vector<2x32xf32>
    %181 = vector.extract_strided_slice %163 {offsets = [0, 64], sizes = [2, 32], strides = [1, 1]} : vector<2x96xf32> to vector<2x32xf32>
    %182 = vector.broadcast %15 : vector<1x32xf32> to vector<2x32xf32>
    %183 = arith.addf %181, %182 : vector<2x32xf32>
    %184 = arith.mulf %171, %183 : vector<2x32xf32>
    %185 = arith.addf %180, %184 : vector<2x32xf32>
    %186 = math.tanh %185 : vector<2x32xf32>
    %cst_41 = arith.constant 1.000000e+00 : f32
    %187 = vector.broadcast %cst_41 : f32 to vector<2x32xf32>
    %188 = arith.subf %187, %179 : vector<2x32xf32>
    %189 = arith.mulf %188, %186 : vector<2x32xf32>
    %190 = arith.mulf %179, %124 : vector<2x32xf32>
    %191 = arith.addf %189, %190 : vector<2x32xf32>
    %c0_42 = arith.constant 0 : index
    %c1 = arith.constant 1 : index
    %c0_43 = arith.constant 0 : index
    %192 = vector.load %arg9[%c0_42, %c1, %c0_43] : memref<2x8x32xf32, #tpu.memory_space<vmem>>, vector<2x1x32xf32>
    %193 = vector.shape_cast %192 : vector<2x1x32xf32> to vector<2x32xf32>
    %194 = vector.shape_cast %191 : vector<2x32xf32> to vector<2x1x32xf32>
    tpu.vector_store %arg9[%c0_42, %c1, %c0_43], %194 {strides = array<i32>} : memref<2x8x32xf32, #tpu.memory_space<vmem>>, vector<2x1x32xf32>,
    %195 = tpu.concatenate %159, %191 in 1 : vector<2x32xf32>, vector<2x32xf32> -> vector<2x64xf32>
    %cst_44 = arith.constant dense<0.000000e+00> : vector<2x288xf32>
    %196 = tpu.matmul %195, %28, %cst_44 {dimension_numbers = #tpu.dot_dimension_numbers<[1], [0], [0], [1], [0, 0, 1, 1], [], []>} : vector<2x64xf32>, vector<64x288xf32>, vector<2x288xf32> -> vector<2x288xf32>
    %197 = vector.extract_strided_slice %21 {offsets = [6, 0], sizes = [2, 96], strides = [1, 1]} : vector<16x96xf32> to vector<2x96xf32>
    %198 = vector.extract_strided_slice %196 {offsets = [0, 0], sizes = [2, 96], strides = [1, 1]} : vector<2x288xf32> to vector<2x96xf32>
    %199 = vector.extract_strided_slice %197 {offsets = [0, 0], sizes = [2, 32], strides = [1, 1]} : vector<2x96xf32> to vector<2x32xf32>
    %200 = vector.extract_strided_slice %198 {offsets = [0, 0], sizes = [2, 32], strides = [1, 1]} : vector<2x96xf32> to vector<2x32xf32>
    %201 = arith.addf %199, %200 : vector<2x32xf32>
    %202 = arith.negf %201 : vector<2x32xf32>
    %203 = math.exp %202 : vector<2x32xf32>
    %cst_45 = arith.constant 1.000000e+00 : f32
    %204 = vector.broadcast %cst_45 : f32 to vector<2x32xf32>
    %205 = arith.addf %204, %203 : vector<2x32xf32>
    %206 = arith.divf %204, %205 : vector<2x32xf32>
    %207 = vector.extract_strided_slice %197 {offsets = [0, 32], sizes = [2, 32], strides = [1, 1]} : vector<2x96xf32> to vector<2x32xf32>
    %208 = vector.extract_strided_slice %198 {offsets = [0, 32], sizes = [2, 32], strides = [1, 1]} : vector<2x96xf32> to vector<2x32xf32>
    %209 = arith.addf %207, %208 : vector<2x32xf32>
    %210 = arith.negf %209 : vector<2x32xf32>
    %211 = math.exp %210 : vector<2x32xf32>
    %cst_46 = arith.constant 1.000000e+00 : f32
    %212 = vector.broadcast %cst_46 : f32 to vector<2x32xf32>
    %213 = arith.addf %212, %211 : vector<2x32xf32>
    %214 = arith.divf %212, %213 : vector<2x32xf32>
    %215 = vector.extract_strided_slice %197 {offsets = [0, 64], sizes = [2, 32], strides = [1, 1]} : vector<2x96xf32> to vector<2x32xf32>
    %216 = vector.extract_strided_slice %198 {offsets = [0, 64], sizes = [2, 32], strides = [1, 1]} : vector<2x96xf32> to vector<2x32xf32>
    %217 = vector.broadcast %14 : vector<1x32xf32> to vector<2x32xf32>
    %218 = arith.addf %216, %217 : vector<2x32xf32>
    %219 = arith.mulf %206, %218 : vector<2x32xf32>
    %220 = arith.addf %215, %219 : vector<2x32xf32>
    %221 = math.tanh %220 : vector<2x32xf32>
    %cst_47 = arith.constant 1.000000e+00 : f32
    %222 = vector.broadcast %cst_47 : f32 to vector<2x32xf32>
    %223 = arith.subf %222, %214 : vector<2x32xf32>
    %224 = arith.mulf %223, %221 : vector<2x32xf32>
    %225 = arith.mulf %214, %159 : vector<2x32xf32>
    %226 = arith.addf %224, %225 : vector<2x32xf32>
    %227 = vector.extract_strided_slice %196 {offsets = [0, 96], sizes = [2, 96], strides = [1, 1]} : vector<2x288xf32> to vector<2x96xf32>
    %228 = vector.broadcast %13 : vector<1x96xf32> to vector<2x96xf32>
    %229 = arith.addf %227, %228 : vector<2x96xf32>
    %230 = vector.extract_strided_slice %196 {offsets = [0, 192], sizes = [2, 96], strides = [1, 1]} : vector<2x288xf32> to vector<2x96xf32>
    %231 = vector.extract_strided_slice %229 {offsets = [0, 0], sizes = [2, 32], strides = [1, 1]} : vector<2x96xf32> to vector<2x32xf32>
    %232 = vector.extract_strided_slice %230 {offsets = [0, 0], sizes = [2, 32], strides = [1, 1]} : vector<2x96xf32> to vector<2x32xf32>
    %233 = arith.addf %231, %232 : vector<2x32xf32>
    %234 = arith.negf %233 : vector<2x32xf32>
    %235 = math.exp %234 : vector<2x32xf32>
    %cst_48 = arith.constant 1.000000e+00 : f32
    %236 = vector.broadcast %cst_48 : f32 to vector<2x32xf32>
    %237 = arith.addf %236, %235 : vector<2x32xf32>
    %238 = arith.divf %236, %237 : vector<2x32xf32>
    %239 = vector.extract_strided_slice %229 {offsets = [0, 32], sizes = [2, 32], strides = [1, 1]} : vector<2x96xf32> to vector<2x32xf32>
    %240 = vector.extract_strided_slice %230 {offsets = [0, 32], sizes = [2, 32], strides = [1, 1]} : vector<2x96xf32> to vector<2x32xf32>
    %241 = arith.addf %239, %240 : vector<2x32xf32>
    %242 = arith.negf %241 : vector<2x32xf32>
    %243 = math.exp %242 : vector<2x32xf32>
    %cst_49 = arith.constant 1.000000e+00 : f32
    %244 = vector.broadcast %cst_49 : f32 to vector<2x32xf32>
    %245 = arith.addf %244, %243 : vector<2x32xf32>
    %246 = arith.divf %244, %245 : vector<2x32xf32>
    %247 = vector.extract_strided_slice %229 {offsets = [0, 64], sizes = [2, 32], strides = [1, 1]} : vector<2x96xf32> to vector<2x32xf32>
    %248 = vector.extract_strided_slice %230 {offsets = [0, 64], sizes = [2, 32], strides = [1, 1]} : vector<2x96xf32> to vector<2x32xf32>
    %249 = vector.broadcast %15 : vector<1x32xf32> to vector<2x32xf32>
    %250 = arith.addf %248, %249 : vector<2x32xf32>
    %251 = arith.mulf %238, %250 : vector<2x32xf32>
    %252 = arith.addf %247, %251 : vector<2x32xf32>
    %253 = math.tanh %252 : vector<2x32xf32>
    %cst_50 = arith.constant 1.000000e+00 : f32
    %254 = vector.broadcast %cst_50 : f32 to vector<2x32xf32>
    %255 = arith.subf %254, %246 : vector<2x32xf32>
    %256 = arith.mulf %255, %253 : vector<2x32xf32>
    %257 = arith.mulf %246, %191 : vector<2x32xf32>
    %258 = arith.addf %256, %257 : vector<2x32xf32>
    %c0_51 = arith.constant 0 : index
    %c2 = arith.constant 2 : index
    %c0_52 = arith.constant 0 : index
    %259 = vector.load %arg9[%c0_51, %c2, %c0_52] : memref<2x8x32xf32, #tpu.memory_space<vmem>>, vector<2x1x32xf32>
    %260 = vector.shape_cast %259 : vector<2x1x32xf32> to vector<2x32xf32>
    %261 = vector.shape_cast %258 : vector<2x32xf32> to vector<2x1x32xf32>
    tpu.vector_store %arg9[%c0_51, %c2, %c0_52], %261 {strides = array<i32>} : memref<2x8x32xf32, #tpu.memory_space<vmem>>, vector<2x1x32xf32>,
    %262 = tpu.concatenate %226, %258 in 1 : vector<2x32xf32>, vector<2x32xf32> -> vector<2x64xf32>
    %cst_53 = arith.constant dense<0.000000e+00> : vector<2x288xf32>
    %263 = tpu.matmul %262, %28, %cst_53 {dimension_numbers = #tpu.dot_dimension_numbers<[1], [0], [0], [1], [0, 0, 1, 1], [], []>} : vector<2x64xf32>, vector<64x288xf32>, vector<2x288xf32> -> vector<2x288xf32>
    %264 = vector.extract_strided_slice %21 {offsets = [8, 0], sizes = [2, 96], strides = [1, 1]} : vector<16x96xf32> to vector<2x96xf32>
    %265 = vector.extract_strided_slice %263 {offsets = [0, 0], sizes = [2, 96], strides = [1, 1]} : vector<2x288xf32> to vector<2x96xf32>
    %266 = vector.extract_strided_slice %264 {offsets = [0, 0], sizes = [2, 32], strides = [1, 1]} : vector<2x96xf32> to vector<2x32xf32>
    %267 = vector.extract_strided_slice %265 {offsets = [0, 0], sizes = [2, 32], strides = [1, 1]} : vector<2x96xf32> to vector<2x32xf32>
    %268 = arith.addf %266, %267 : vector<2x32xf32>
    %269 = arith.negf %268 : vector<2x32xf32>
    %270 = math.exp %269 : vector<2x32xf32>
    %cst_54 = arith.constant 1.000000e+00 : f32
    %271 = vector.broadcast %cst_54 : f32 to vector<2x32xf32>
    %272 = arith.addf %271, %270 : vector<2x32xf32>
    %273 = arith.divf %271, %272 : vector<2x32xf32>
    %274 = vector.extract_strided_slice %264 {offsets = [0, 32], sizes = [2, 32], strides = [1, 1]} : vector<2x96xf32> to vector<2x32xf32>
    %275 = vector.extract_strided_slice %265 {offsets = [0, 32], sizes = [2, 32], strides = [1, 1]} : vector<2x96xf32> to vector<2x32xf32>
    %276 = arith.addf %274, %275 : vector<2x32xf32>
    %277 = arith.negf %276 : vector<2x32xf32>
    %278 = math.exp %277 : vector<2x32xf32>
    %cst_55 = arith.constant 1.000000e+00 : f32
    %279 = vector.broadcast %cst_55 : f32 to vector<2x32xf32>
    %280 = arith.addf %279, %278 : vector<2x32xf32>
    %281 = arith.divf %279, %280 : vector<2x32xf32>
    %282 = vector.extract_strided_slice %264 {offsets = [0, 64], sizes = [2, 32], strides = [1, 1]} : vector<2x96xf32> to vector<2x32xf32>
    %283 = vector.extract_strided_slice %265 {offsets = [0, 64], sizes = [2, 32], strides = [1, 1]} : vector<2x96xf32> to vector<2x32xf32>
    %284 = vector.broadcast %14 : vector<1x32xf32> to vector<2x32xf32>
    %285 = arith.addf %283, %284 : vector<2x32xf32>
    %286 = arith.mulf %273, %285 : vector<2x32xf32>
    %287 = arith.addf %282, %286 : vector<2x32xf32>
    %288 = math.tanh %287 : vector<2x32xf32>
    %cst_56 = arith.constant 1.000000e+00 : f32
    %289 = vector.broadcast %cst_56 : f32 to vector<2x32xf32>
    %290 = arith.subf %289, %281 : vector<2x32xf32>
    %291 = arith.mulf %290, %288 : vector<2x32xf32>
    %292 = arith.mulf %281, %226 : vector<2x32xf32>
    %293 = arith.addf %291, %292 : vector<2x32xf32>
    %294 = vector.extract_strided_slice %263 {offsets = [0, 96], sizes = [2, 96], strides = [1, 1]} : vector<2x288xf32> to vector<2x96xf32>
    %295 = vector.broadcast %13 : vector<1x96xf32> to vector<2x96xf32>
    %296 = arith.addf %294, %295 : vector<2x96xf32>
    %297 = vector.extract_strided_slice %263 {offsets = [0, 192], sizes = [2, 96], strides = [1, 1]} : vector<2x288xf32> to vector<2x96xf32>
    %298 = vector.extract_strided_slice %296 {offsets = [0, 0], sizes = [2, 32], strides = [1, 1]} : vector<2x96xf32> to vector<2x32xf32>
    %299 = vector.extract_strided_slice %297 {offsets = [0, 0], sizes = [2, 32], strides = [1, 1]} : vector<2x96xf32> to vector<2x32xf32>
    %300 = arith.addf %298, %299 : vector<2x32xf32>
    %301 = arith.negf %300 : vector<2x32xf32>
    %302 = math.exp %301 : vector<2x32xf32>
    %cst_57 = arith.constant 1.000000e+00 : f32
    %303 = vector.broadcast %cst_57 : f32 to vector<2x32xf32>
    %304 = arith.addf %303, %302 : vector<2x32xf32>
    %305 = arith.divf %303, %304 : vector<2x32xf32>
    %306 = vector.extract_strided_slice %296 {offsets = [0, 32], sizes = [2, 32], strides = [1, 1]} : vector<2x96xf32> to vector<2x32xf32>
    %307 = vector.extract_strided_slice %297 {offsets = [0, 32], sizes = [2, 32], strides = [1, 1]} : vector<2x96xf32> to vector<2x32xf32>
    %308 = arith.addf %306, %307 : vector<2x32xf32>
    %309 = arith.negf %308 : vector<2x32xf32>
    %310 = math.exp %309 : vector<2x32xf32>
    %cst_58 = arith.constant 1.000000e+00 : f32
    %311 = vector.broadcast %cst_58 : f32 to vector<2x32xf32>
    %312 = arith.addf %311, %310 : vector<2x32xf32>
    %313 = arith.divf %311, %312 : vector<2x32xf32>
    %314 = vector.extract_strided_slice %296 {offsets = [0, 64], sizes = [2, 32], strides = [1, 1]} : vector<2x96xf32> to vector<2x32xf32>
    %315 = vector.extract_strided_slice %297 {offsets = [0, 64], sizes = [2, 32], strides = [1, 1]} : vector<2x96xf32> to vector<2x32xf32>
    %316 = vector.broadcast %15 : vector<1x32xf32> to vector<2x32xf32>
    %317 = arith.addf %315, %316 : vector<2x32xf32>
    %318 = arith.mulf %305, %317 : vector<2x32xf32>
    %319 = arith.addf %314, %318 : vector<2x32xf32>
    %320 = math.tanh %319 : vector<2x32xf32>
    %cst_59 = arith.constant 1.000000e+00 : f32
    %321 = vector.broadcast %cst_59 : f32 to vector<2x32xf32>
    %322 = arith.subf %321, %313 : vector<2x32xf32>
    %323 = arith.mulf %322, %320 : vector<2x32xf32>
    %324 = arith.mulf %313, %258 : vector<2x32xf32>
    %325 = arith.addf %323, %324 : vector<2x32xf32>
    %c0_60 = arith.constant 0 : index
    %c3 = arith.constant 3 : index
    %c0_61 = arith.constant 0 : index
    %326 = vector.load %arg9[%c0_60, %c3, %c0_61] : memref<2x8x32xf32, #tpu.memory_space<vmem>>, vector<2x1x32xf32>
    %327 = vector.shape_cast %326 : vector<2x1x32xf32> to vector<2x32xf32>
    %328 = vector.shape_cast %325 : vector<2x32xf32> to vector<2x1x32xf32>
    tpu.vector_store %arg9[%c0_60, %c3, %c0_61], %328 {strides = array<i32>} : memref<2x8x32xf32, #tpu.memory_space<vmem>>, vector<2x1x32xf32>,
    %329 = tpu.concatenate %293, %325 in 1 : vector<2x32xf32>, vector<2x32xf32> -> vector<2x64xf32>
    %cst_62 = arith.constant dense<0.000000e+00> : vector<2x288xf32>
    %330 = tpu.matmul %329, %28, %cst_62 {dimension_numbers = #tpu.dot_dimension_numbers<[1], [0], [0], [1], [0, 0, 1, 1], [], []>} : vector<2x64xf32>, vector<64x288xf32>, vector<2x288xf32> -> vector<2x288xf32>
    %331 = vector.extract_strided_slice %21 {offsets = [10, 0], sizes = [2, 96], strides = [1, 1]} : vector<16x96xf32> to vector<2x96xf32>
    %332 = vector.extract_strided_slice %330 {offsets = [0, 0], sizes = [2, 96], strides = [1, 1]} : vector<2x288xf32> to vector<2x96xf32>
    %333 = vector.extract_strided_slice %331 {offsets = [0, 0], sizes = [2, 32], strides = [1, 1]} : vector<2x96xf32> to vector<2x32xf32>
    %334 = vector.extract_strided_slice %332 {offsets = [0, 0], sizes = [2, 32], strides = [1, 1]} : vector<2x96xf32> to vector<2x32xf32>
    %335 = arith.addf %333, %334 : vector<2x32xf32>
    %336 = arith.negf %335 : vector<2x32xf32>
    %337 = math.exp %336 : vector<2x32xf32>
    %cst_63 = arith.constant 1.000000e+00 : f32
    %338 = vector.broadcast %cst_63 : f32 to vector<2x32xf32>
    %339 = arith.addf %338, %337 : vector<2x32xf32>
    %340 = arith.divf %338, %339 : vector<2x32xf32>
    %341 = vector.extract_strided_slice %331 {offsets = [0, 32], sizes = [2, 32], strides = [1, 1]} : vector<2x96xf32> to vector<2x32xf32>
    %342 = vector.extract_strided_slice %332 {offsets = [0, 32], sizes = [2, 32], strides = [1, 1]} : vector<2x96xf32> to vector<2x32xf32>
    %343 = arith.addf %341, %342 : vector<2x32xf32>
    %344 = arith.negf %343 : vector<2x32xf32>
    %345 = math.exp %344 : vector<2x32xf32>
    %cst_64 = arith.constant 1.000000e+00 : f32
    %346 = vector.broadcast %cst_64 : f32 to vector<2x32xf32>
    %347 = arith.addf %346, %345 : vector<2x32xf32>
    %348 = arith.divf %346, %347 : vector<2x32xf32>
    %349 = vector.extract_strided_slice %331 {offsets = [0, 64], sizes = [2, 32], strides = [1, 1]} : vector<2x96xf32> to vector<2x32xf32>
    %350 = vector.extract_strided_slice %332 {offsets = [0, 64], sizes = [2, 32], strides = [1, 1]} : vector<2x96xf32> to vector<2x32xf32>
    %351 = vector.broadcast %14 : vector<1x32xf32> to vector<2x32xf32>
    %352 = arith.addf %350, %351 : vector<2x32xf32>
    %353 = arith.mulf %340, %352 : vector<2x32xf32>
    %354 = arith.addf %349, %353 : vector<2x32xf32>
    %355 = math.tanh %354 : vector<2x32xf32>
    %cst_65 = arith.constant 1.000000e+00 : f32
    %356 = vector.broadcast %cst_65 : f32 to vector<2x32xf32>
    %357 = arith.subf %356, %348 : vector<2x32xf32>
    %358 = arith.mulf %357, %355 : vector<2x32xf32>
    %359 = arith.mulf %348, %293 : vector<2x32xf32>
    %360 = arith.addf %358, %359 : vector<2x32xf32>
    %361 = vector.extract_strided_slice %330 {offsets = [0, 96], sizes = [2, 96], strides = [1, 1]} : vector<2x288xf32> to vector<2x96xf32>
    %362 = vector.broadcast %13 : vector<1x96xf32> to vector<2x96xf32>
    %363 = arith.addf %361, %362 : vector<2x96xf32>
    %364 = vector.extract_strided_slice %330 {offsets = [0, 192], sizes = [2, 96], strides = [1, 1]} : vector<2x288xf32> to vector<2x96xf32>
    %365 = vector.extract_strided_slice %363 {offsets = [0, 0], sizes = [2, 32], strides = [1, 1]} : vector<2x96xf32> to vector<2x32xf32>
    %366 = vector.extract_strided_slice %364 {offsets = [0, 0], sizes = [2, 32], strides = [1, 1]} : vector<2x96xf32> to vector<2x32xf32>
    %367 = arith.addf %365, %366 : vector<2x32xf32>
    %368 = arith.negf %367 : vector<2x32xf32>
    %369 = math.exp %368 : vector<2x32xf32>
    %cst_66 = arith.constant 1.000000e+00 : f32
    %370 = vector.broadcast %cst_66 : f32 to vector<2x32xf32>
    %371 = arith.addf %370, %369 : vector<2x32xf32>
    %372 = arith.divf %370, %371 : vector<2x32xf32>
    %373 = vector.extract_strided_slice %363 {offsets = [0, 32], sizes = [2, 32], strides = [1, 1]} : vector<2x96xf32> to vector<2x32xf32>
    %374 = vector.extract_strided_slice %364 {offsets = [0, 32], sizes = [2, 32], strides = [1, 1]} : vector<2x96xf32> to vector<2x32xf32>
    %375 = arith.addf %373, %374 : vector<2x32xf32>
    %376 = arith.negf %375 : vector<2x32xf32>
    %377 = math.exp %376 : vector<2x32xf32>
    %cst_67 = arith.constant 1.000000e+00 : f32
    %378 = vector.broadcast %cst_67 : f32 to vector<2x32xf32>
    %379 = arith.addf %378, %377 : vector<2x32xf32>
    %380 = arith.divf %378, %379 : vector<2x32xf32>
    %381 = vector.extract_strided_slice %363 {offsets = [0, 64], sizes = [2, 32], strides = [1, 1]} : vector<2x96xf32> to vector<2x32xf32>
    %382 = vector.extract_strided_slice %364 {offsets = [0, 64], sizes = [2, 32], strides = [1, 1]} : vector<2x96xf32> to vector<2x32xf32>
    %383 = vector.broadcast %15 : vector<1x32xf32> to vector<2x32xf32>
    %384 = arith.addf %382, %383 : vector<2x32xf32>
    %385 = arith.mulf %372, %384 : vector<2x32xf32>
    %386 = arith.addf %381, %385 : vector<2x32xf32>
    %387 = math.tanh %386 : vector<2x32xf32>
    %cst_68 = arith.constant 1.000000e+00 : f32
    %388 = vector.broadcast %cst_68 : f32 to vector<2x32xf32>
    %389 = arith.subf %388, %380 : vector<2x32xf32>
    %390 = arith.mulf %389, %387 : vector<2x32xf32>
    %391 = arith.mulf %380, %325 : vector<2x32xf32>
    %392 = arith.addf %390, %391 : vector<2x32xf32>
    %c0_69 = arith.constant 0 : index
    %c4 = arith.constant 4 : index
    %c0_70 = arith.constant 0 : index
    %393 = vector.load %arg9[%c0_69, %c4, %c0_70] : memref<2x8x32xf32, #tpu.memory_space<vmem>>, vector<2x1x32xf32>
    %394 = vector.shape_cast %393 : vector<2x1x32xf32> to vector<2x32xf32>
    %395 = vector.shape_cast %392 : vector<2x32xf32> to vector<2x1x32xf32>
    tpu.vector_store %arg9[%c0_69, %c4, %c0_70], %395 {strides = array<i32>} : memref<2x8x32xf32, #tpu.memory_space<vmem>>, vector<2x1x32xf32>,
    %396 = tpu.concatenate %360, %392 in 1 : vector<2x32xf32>, vector<2x32xf32> -> vector<2x64xf32>
    %cst_71 = arith.constant dense<0.000000e+00> : vector<2x288xf32>
    %397 = tpu.matmul %396, %28, %cst_71 {dimension_numbers = #tpu.dot_dimension_numbers<[1], [0], [0], [1], [0, 0, 1, 1], [], []>} : vector<2x64xf32>, vector<64x288xf32>, vector<2x288xf32> -> vector<2x288xf32>
    %398 = vector.extract_strided_slice %21 {offsets = [12, 0], sizes = [2, 96], strides = [1, 1]} : vector<16x96xf32> to vector<2x96xf32>
    %399 = vector.extract_strided_slice %397 {offsets = [0, 0], sizes = [2, 96], strides = [1, 1]} : vector<2x288xf32> to vector<2x96xf32>
    %400 = vector.extract_strided_slice %398 {offsets = [0, 0], sizes = [2, 32], strides = [1, 1]} : vector<2x96xf32> to vector<2x32xf32>
    %401 = vector.extract_strided_slice %399 {offsets = [0, 0], sizes = [2, 32], strides = [1, 1]} : vector<2x96xf32> to vector<2x32xf32>
    %402 = arith.addf %400, %401 : vector<2x32xf32>
    %403 = arith.negf %402 : vector<2x32xf32>
    %404 = math.exp %403 : vector<2x32xf32>
    %cst_72 = arith.constant 1.000000e+00 : f32
    %405 = vector.broadcast %cst_72 : f32 to vector<2x32xf32>
    %406 = arith.addf %405, %404 : vector<2x32xf32>
    %407 = arith.divf %405, %406 : vector<2x32xf32>
    %408 = vector.extract_strided_slice %398 {offsets = [0, 32], sizes = [2, 32], strides = [1, 1]} : vector<2x96xf32> to vector<2x32xf32>
    %409 = vector.extract_strided_slice %399 {offsets = [0, 32], sizes = [2, 32], strides = [1, 1]} : vector<2x96xf32> to vector<2x32xf32>
    %410 = arith.addf %408, %409 : vector<2x32xf32>
    %411 = arith.negf %410 : vector<2x32xf32>
    %412 = math.exp %411 : vector<2x32xf32>
    %cst_73 = arith.constant 1.000000e+00 : f32
    %413 = vector.broadcast %cst_73 : f32 to vector<2x32xf32>
    %414 = arith.addf %413, %412 : vector<2x32xf32>
    %415 = arith.divf %413, %414 : vector<2x32xf32>
    %416 = vector.extract_strided_slice %398 {offsets = [0, 64], sizes = [2, 32], strides = [1, 1]} : vector<2x96xf32> to vector<2x32xf32>
    %417 = vector.extract_strided_slice %399 {offsets = [0, 64], sizes = [2, 32], strides = [1, 1]} : vector<2x96xf32> to vector<2x32xf32>
    %418 = vector.broadcast %14 : vector<1x32xf32> to vector<2x32xf32>
    %419 = arith.addf %417, %418 : vector<2x32xf32>
    %420 = arith.mulf %407, %419 : vector<2x32xf32>
    %421 = arith.addf %416, %420 : vector<2x32xf32>
    %422 = math.tanh %421 : vector<2x32xf32>
    %cst_74 = arith.constant 1.000000e+00 : f32
    %423 = vector.broadcast %cst_74 : f32 to vector<2x32xf32>
    %424 = arith.subf %423, %415 : vector<2x32xf32>
    %425 = arith.mulf %424, %422 : vector<2x32xf32>
    %426 = arith.mulf %415, %360 : vector<2x32xf32>
    %427 = arith.addf %425, %426 : vector<2x32xf32>
    %428 = vector.extract_strided_slice %397 {offsets = [0, 96], sizes = [2, 96], strides = [1, 1]} : vector<2x288xf32> to vector<2x96xf32>
    %429 = vector.broadcast %13 : vector<1x96xf32> to vector<2x96xf32>
    %430 = arith.addf %428, %429 : vector<2x96xf32>
    %431 = vector.extract_strided_slice %397 {offsets = [0, 192], sizes = [2, 96], strides = [1, 1]} : vector<2x288xf32> to vector<2x96xf32>
    %432 = vector.extract_strided_slice %430 {offsets = [0, 0], sizes = [2, 32], strides = [1, 1]} : vector<2x96xf32> to vector<2x32xf32>
    %433 = vector.extract_strided_slice %431 {offsets = [0, 0], sizes = [2, 32], strides = [1, 1]} : vector<2x96xf32> to vector<2x32xf32>
    %434 = arith.addf %432, %433 : vector<2x32xf32>
    %435 = arith.negf %434 : vector<2x32xf32>
    %436 = math.exp %435 : vector<2x32xf32>
    %cst_75 = arith.constant 1.000000e+00 : f32
    %437 = vector.broadcast %cst_75 : f32 to vector<2x32xf32>
    %438 = arith.addf %437, %436 : vector<2x32xf32>
    %439 = arith.divf %437, %438 : vector<2x32xf32>
    %440 = vector.extract_strided_slice %430 {offsets = [0, 32], sizes = [2, 32], strides = [1, 1]} : vector<2x96xf32> to vector<2x32xf32>
    %441 = vector.extract_strided_slice %431 {offsets = [0, 32], sizes = [2, 32], strides = [1, 1]} : vector<2x96xf32> to vector<2x32xf32>
    %442 = arith.addf %440, %441 : vector<2x32xf32>
    %443 = arith.negf %442 : vector<2x32xf32>
    %444 = math.exp %443 : vector<2x32xf32>
    %cst_76 = arith.constant 1.000000e+00 : f32
    %445 = vector.broadcast %cst_76 : f32 to vector<2x32xf32>
    %446 = arith.addf %445, %444 : vector<2x32xf32>
    %447 = arith.divf %445, %446 : vector<2x32xf32>
    %448 = vector.extract_strided_slice %430 {offsets = [0, 64], sizes = [2, 32], strides = [1, 1]} : vector<2x96xf32> to vector<2x32xf32>
    %449 = vector.extract_strided_slice %431 {offsets = [0, 64], sizes = [2, 32], strides = [1, 1]} : vector<2x96xf32> to vector<2x32xf32>
    %450 = vector.broadcast %15 : vector<1x32xf32> to vector<2x32xf32>
    %451 = arith.addf %449, %450 : vector<2x32xf32>
    %452 = arith.mulf %439, %451 : vector<2x32xf32>
    %453 = arith.addf %448, %452 : vector<2x32xf32>
    %454 = math.tanh %453 : vector<2x32xf32>
    %cst_77 = arith.constant 1.000000e+00 : f32
    %455 = vector.broadcast %cst_77 : f32 to vector<2x32xf32>
    %456 = arith.subf %455, %447 : vector<2x32xf32>
    %457 = arith.mulf %456, %454 : vector<2x32xf32>
    %458 = arith.mulf %447, %392 : vector<2x32xf32>
    %459 = arith.addf %457, %458 : vector<2x32xf32>
    %c0_78 = arith.constant 0 : index
    %c5 = arith.constant 5 : index
    %c0_79 = arith.constant 0 : index
    %460 = vector.load %arg9[%c0_78, %c5, %c0_79] : memref<2x8x32xf32, #tpu.memory_space<vmem>>, vector<2x1x32xf32>
    %461 = vector.shape_cast %460 : vector<2x1x32xf32> to vector<2x32xf32>
    %462 = vector.shape_cast %459 : vector<2x32xf32> to vector<2x1x32xf32>
    tpu.vector_store %arg9[%c0_78, %c5, %c0_79], %462 {strides = array<i32>} : memref<2x8x32xf32, #tpu.memory_space<vmem>>, vector<2x1x32xf32>,
    %463 = tpu.concatenate %427, %459 in 1 : vector<2x32xf32>, vector<2x32xf32> -> vector<2x64xf32>
    %cst_80 = arith.constant dense<0.000000e+00> : vector<2x288xf32>
    %464 = tpu.matmul %463, %28, %cst_80 {dimension_numbers = #tpu.dot_dimension_numbers<[1], [0], [0], [1], [0, 0, 1, 1], [], []>} : vector<2x64xf32>, vector<64x288xf32>, vector<2x288xf32> -> vector<2x288xf32>
    %465 = vector.extract_strided_slice %21 {offsets = [14, 0], sizes = [2, 96], strides = [1, 1]} : vector<16x96xf32> to vector<2x96xf32>
    %466 = vector.extract_strided_slice %464 {offsets = [0, 0], sizes = [2, 96], strides = [1, 1]} : vector<2x288xf32> to vector<2x96xf32>
    %467 = vector.extract_strided_slice %465 {offsets = [0, 0], sizes = [2, 32], strides = [1, 1]} : vector<2x96xf32> to vector<2x32xf32>
    %468 = vector.extract_strided_slice %466 {offsets = [0, 0], sizes = [2, 32], strides = [1, 1]} : vector<2x96xf32> to vector<2x32xf32>
    %469 = arith.addf %467, %468 : vector<2x32xf32>
    %470 = arith.negf %469 : vector<2x32xf32>
    %471 = math.exp %470 : vector<2x32xf32>
    %cst_81 = arith.constant 1.000000e+00 : f32
    %472 = vector.broadcast %cst_81 : f32 to vector<2x32xf32>
    %473 = arith.addf %472, %471 : vector<2x32xf32>
    %474 = arith.divf %472, %473 : vector<2x32xf32>
    %475 = vector.extract_strided_slice %465 {offsets = [0, 32], sizes = [2, 32], strides = [1, 1]} : vector<2x96xf32> to vector<2x32xf32>
    %476 = vector.extract_strided_slice %466 {offsets = [0, 32], sizes = [2, 32], strides = [1, 1]} : vector<2x96xf32> to vector<2x32xf32>
    %477 = arith.addf %475, %476 : vector<2x32xf32>
    %478 = arith.negf %477 : vector<2x32xf32>
    %479 = math.exp %478 : vector<2x32xf32>
    %cst_82 = arith.constant 1.000000e+00 : f32
    %480 = vector.broadcast %cst_82 : f32 to vector<2x32xf32>
    %481 = arith.addf %480, %479 : vector<2x32xf32>
    %482 = arith.divf %480, %481 : vector<2x32xf32>
    %483 = vector.extract_strided_slice %465 {offsets = [0, 64], sizes = [2, 32], strides = [1, 1]} : vector<2x96xf32> to vector<2x32xf32>
    %484 = vector.extract_strided_slice %466 {offsets = [0, 64], sizes = [2, 32], strides = [1, 1]} : vector<2x96xf32> to vector<2x32xf32>
    %485 = vector.broadcast %14 : vector<1x32xf32> to vector<2x32xf32>
    %486 = arith.addf %484, %485 : vector<2x32xf32>
    %487 = arith.mulf %474, %486 : vector<2x32xf32>
    %488 = arith.addf %483, %487 : vector<2x32xf32>
    %489 = math.tanh %488 : vector<2x32xf32>
    %cst_83 = arith.constant 1.000000e+00 : f32
    %490 = vector.broadcast %cst_83 : f32 to vector<2x32xf32>
    %491 = arith.subf %490, %482 : vector<2x32xf32>
    %492 = arith.mulf %491, %489 : vector<2x32xf32>
    %493 = arith.mulf %482, %427 : vector<2x32xf32>
    %494 = arith.addf %492, %493 : vector<2x32xf32>
    %495 = vector.extract_strided_slice %464 {offsets = [0, 96], sizes = [2, 96], strides = [1, 1]} : vector<2x288xf32> to vector<2x96xf32>
    %496 = vector.broadcast %13 : vector<1x96xf32> to vector<2x96xf32>
    %497 = arith.addf %495, %496 : vector<2x96xf32>
    %498 = vector.extract_strided_slice %464 {offsets = [0, 192], sizes = [2, 96], strides = [1, 1]} : vector<2x288xf32> to vector<2x96xf32>
    %499 = vector.extract_strided_slice %497 {offsets = [0, 0], sizes = [2, 32], strides = [1, 1]} : vector<2x96xf32> to vector<2x32xf32>
    %500 = vector.extract_strided_slice %498 {offsets = [0, 0], sizes = [2, 32], strides = [1, 1]} : vector<2x96xf32> to vector<2x32xf32>
    %501 = arith.addf %499, %500 : vector<2x32xf32>
    %502 = arith.negf %501 : vector<2x32xf32>
    %503 = math.exp %502 : vector<2x32xf32>
    %cst_84 = arith.constant 1.000000e+00 : f32
    %504 = vector.broadcast %cst_84 : f32 to vector<2x32xf32>
    %505 = arith.addf %504, %503 : vector<2x32xf32>
    %506 = arith.divf %504, %505 : vector<2x32xf32>
    %507 = vector.extract_strided_slice %497 {offsets = [0, 32], sizes = [2, 32], strides = [1, 1]} : vector<2x96xf32> to vector<2x32xf32>
    %508 = vector.extract_strided_slice %498 {offsets = [0, 32], sizes = [2, 32], strides = [1, 1]} : vector<2x96xf32> to vector<2x32xf32>
    %509 = arith.addf %507, %508 : vector<2x32xf32>
    %510 = arith.negf %509 : vector<2x32xf32>
    %511 = math.exp %510 : vector<2x32xf32>
    %cst_85 = arith.constant 1.000000e+00 : f32
    %512 = vector.broadcast %cst_85 : f32 to vector<2x32xf32>
    %513 = arith.addf %512, %511 : vector<2x32xf32>
    %514 = arith.divf %512, %513 : vector<2x32xf32>
    %515 = vector.extract_strided_slice %497 {offsets = [0, 64], sizes = [2, 32], strides = [1, 1]} : vector<2x96xf32> to vector<2x32xf32>
    %516 = vector.extract_strided_slice %498 {offsets = [0, 64], sizes = [2, 32], strides = [1, 1]} : vector<2x96xf32> to vector<2x32xf32>
    %517 = vector.broadcast %15 : vector<1x32xf32> to vector<2x32xf32>
    %518 = arith.addf %516, %517 : vector<2x32xf32>
    %519 = arith.mulf %506, %518 : vector<2x32xf32>
    %520 = arith.addf %515, %519 : vector<2x32xf32>
    %521 = math.tanh %520 : vector<2x32xf32>
    %cst_86 = arith.constant 1.000000e+00 : f32
    %522 = vector.broadcast %cst_86 : f32 to vector<2x32xf32>
    %523 = arith.subf %522, %514 : vector<2x32xf32>
    %524 = arith.mulf %523, %521 : vector<2x32xf32>
    %525 = arith.mulf %514, %459 : vector<2x32xf32>
    %526 = arith.addf %524, %525 : vector<2x32xf32>
    %c0_87 = arith.constant 0 : index
    %c6 = arith.constant 6 : index
    %c0_88 = arith.constant 0 : index
    %527 = vector.load %arg9[%c0_87, %c6, %c0_88] : memref<2x8x32xf32, #tpu.memory_space<vmem>>, vector<2x1x32xf32>
    %528 = vector.shape_cast %527 : vector<2x1x32xf32> to vector<2x32xf32>
    %529 = vector.shape_cast %526 : vector<2x32xf32> to vector<2x1x32xf32>
    tpu.vector_store %arg9[%c0_87, %c6, %c0_88], %529 {strides = array<i32>} : memref<2x8x32xf32, #tpu.memory_space<vmem>>, vector<2x1x32xf32>,
    %530 = tpu.concatenate %494, %526 in 1 : vector<2x32xf32>, vector<2x32xf32> -> vector<2x64xf32>
    %cst_89 = arith.constant dense<0.000000e+00> : vector<2x288xf32>
    %531 = tpu.matmul %530, %28, %cst_89 {dimension_numbers = #tpu.dot_dimension_numbers<[1], [0], [0], [1], [0, 0, 1, 1], [], []>} : vector<2x64xf32>, vector<64x288xf32>, vector<2x288xf32> -> vector<2x288xf32>
    %532 = vector.extract_strided_slice %531 {offsets = [0, 96], sizes = [2, 96], strides = [1, 1]} : vector<2x288xf32> to vector<2x96xf32>
    %533 = vector.broadcast %13 : vector<1x96xf32> to vector<2x96xf32>
    %534 = arith.addf %532, %533 : vector<2x96xf32>
    %535 = vector.extract_strided_slice %531 {offsets = [0, 192], sizes = [2, 96], strides = [1, 1]} : vector<2x288xf32> to vector<2x96xf32>
    %536 = vector.extract_strided_slice %534 {offsets = [0, 0], sizes = [2, 32], strides = [1, 1]} : vector<2x96xf32> to vector<2x32xf32>
    %537 = vector.extract_strided_slice %535 {offsets = [0, 0], sizes = [2, 32], strides = [1, 1]} : vector<2x96xf32> to vector<2x32xf32>
    %538 = arith.addf %536, %537 : vector<2x32xf32>
    %539 = arith.negf %538 : vector<2x32xf32>
    %540 = math.exp %539 : vector<2x32xf32>
    %cst_90 = arith.constant 1.000000e+00 : f32
    %541 = vector.broadcast %cst_90 : f32 to vector<2x32xf32>
    %542 = arith.addf %541, %540 : vector<2x32xf32>
    %543 = arith.divf %541, %542 : vector<2x32xf32>
    %544 = vector.extract_strided_slice %534 {offsets = [0, 32], sizes = [2, 32], strides = [1, 1]} : vector<2x96xf32> to vector<2x32xf32>
    %545 = vector.extract_strided_slice %535 {offsets = [0, 32], sizes = [2, 32], strides = [1, 1]} : vector<2x96xf32> to vector<2x32xf32>
    %546 = arith.addf %544, %545 : vector<2x32xf32>
    %547 = arith.negf %546 : vector<2x32xf32>
    %548 = math.exp %547 : vector<2x32xf32>
    %cst_91 = arith.constant 1.000000e+00 : f32
    %549 = vector.broadcast %cst_91 : f32 to vector<2x32xf32>
    %550 = arith.addf %549, %548 : vector<2x32xf32>
    %551 = arith.divf %549, %550 : vector<2x32xf32>
    %552 = vector.extract_strided_slice %534 {offsets = [0, 64], sizes = [2, 32], strides = [1, 1]} : vector<2x96xf32> to vector<2x32xf32>
    %553 = vector.extract_strided_slice %535 {offsets = [0, 64], sizes = [2, 32], strides = [1, 1]} : vector<2x96xf32> to vector<2x32xf32>
    %554 = vector.broadcast %15 : vector<1x32xf32> to vector<2x32xf32>
    %555 = arith.addf %553, %554 : vector<2x32xf32>
    %556 = arith.mulf %543, %555 : vector<2x32xf32>
    %557 = arith.addf %552, %556 : vector<2x32xf32>
    %558 = math.tanh %557 : vector<2x32xf32>
    %cst_92 = arith.constant 1.000000e+00 : f32
    %559 = vector.broadcast %cst_92 : f32 to vector<2x32xf32>
    %560 = arith.subf %559, %551 : vector<2x32xf32>
    %561 = arith.mulf %560, %558 : vector<2x32xf32>
    %562 = arith.mulf %551, %526 : vector<2x32xf32>
    %563 = arith.addf %561, %562 : vector<2x32xf32>
    %c0_93 = arith.constant 0 : index
    %c7 = arith.constant 7 : index
    %c0_94 = arith.constant 0 : index
    %564 = vector.load %arg9[%c0_93, %c7, %c0_94] : memref<2x8x32xf32, #tpu.memory_space<vmem>>, vector<2x1x32xf32>
    %565 = vector.shape_cast %564 : vector<2x1x32xf32> to vector<2x32xf32>
    %566 = vector.shape_cast %563 : vector<2x32xf32> to vector<2x1x32xf32>
    tpu.vector_store %arg9[%c0_93, %c7, %c0_94], %566 {strides = array<i32>} : memref<2x8x32xf32, #tpu.memory_space<vmem>>, vector<2x1x32xf32>,
    %c0_95 = arith.constant 0 : index
    %c0_96 = arith.constant 0 : index
    %c0_97 = arith.constant 0 : index
    %567 = vector.load %arg10[%c0_95, %c0_96, %c0_97] : memref<2x2x32xf32, #tpu.memory_space<vmem>>, vector<1x2x32xf32>
    %568 = vector.shape_cast %567 : vector<1x2x32xf32> to vector<2x32xf32>
    %569 = vector.shape_cast %494 : vector<2x32xf32> to vector<1x2x32xf32>
    tpu.vector_store %arg10[%c0_95, %c0_96, %c0_97], %569 {strides = array<i32>} : memref<2x2x32xf32, #tpu.memory_space<vmem>>, vector<1x2x32xf32>,
    %c1_98 = arith.constant 1 : index
    %c0_99 = arith.constant 0 : index
    %c0_100 = arith.constant 0 : index
    %570 = vector.load %arg10[%c1_98, %c0_99, %c0_100] : memref<2x2x32xf32, #tpu.memory_space<vmem>>, vector<1x2x32xf32>
    %571 = vector.shape_cast %570 : vector<1x2x32xf32> to vector<2x32xf32>
    %572 = vector.shape_cast %563 : vector<2x32xf32> to vector<1x2x32xf32>
    tpu.vector_store %arg10[%c1_98, %c0_99, %c0_100], %572 {strides = array<i32>} : memref<2x2x32xf32, #tpu.memory_space<vmem>>, vector<1x2x32xf32>,
    return
  }
}

</mosaic_0001>

<llo_original>
// kernel: tpu_custom_call.1
$region0: #{tpu_custom_call.1}
  #allocation0 [shape = 'u32[]', space=smem, size = 0x4, offset = 0x4, fixed_abs, tag = 'smem constant byte address 0x4 - core index']
  #allocation1 [shape = 'u32[72,128]{1,0:T(1,128)}', space=vmem, size = 0x9000, scoped, tag = 'internal scratch']
  %s0 = inlined_call_operand.hbm [shape: f32[8,2,16], index: 0, kind: input, shape index: {}]
  %s1 = inlined_call_operand.hbm [shape: f32[16,96], index: 1, kind: input, shape index: {}]
  %s2 = inlined_call_operand.hbm [shape: f32[32,96], index: 2, kind: input, shape index: {}]
  %s3 = inlined_call_operand.vmem [shape: f32[1,96], index: 3, kind: input, shape index: {}]
  %s4 = inlined_call_operand.vmem [shape: f32[1,96], index: 4, kind: input, shape index: {}]
  %s5 = inlined_call_operand.hbm [shape: f32[32,96], index: 5, kind: input, shape index: {}]
  %s6 = inlined_call_operand.hbm [shape: f32[32,96], index: 6, kind: input, shape index: {}]
  %s7 = inlined_call_operand.vmem [shape: f32[1,96], index: 7, kind: input, shape index: {}]
  %s8 = inlined_call_operand.vmem [shape: f32[1,96], index: 8, kind: input, shape index: {}]
  %s9 = inlined_call_operand.hbm [shape: f32[2,8,32], index: 9, kind: output, shape index: {0}]
  %s10 = inlined_call_operand.hbm [shape: f32[2,2,32], index: 10, kind: output, shape index: {1}]
  %11 = xla_tuple %s9, %s10
  %s12 = sld [smem:[#allocation0]]
  $region74: #{tpu_custom_call.1} parent=0
    _
  %s14 = ssub.s32 1, %s12
  %s15 = scalar_select 0, %s14, %s12
  $region1: #{tpu_custom_call.1} parent=0
    #allocation2 [shape = 'u8[8192]{0}', space=vmem, size = 0x2000, scoped, tag = 'input window, operand 0, single buffered']
    #allocation3 [shape = 's32[1]{0}', space=sflag, size = 0x4, scoped, tag = 'scoped memory for tpu_custom_call.1']
    #allocation4 [shape = 's32[1]{0}', space=sflag, size = 0x4, scoped, tag = 'scoped memory for tpu_custom_call.1']
    #allocation5 [shape = 'u8[8192]{0}', space=vmem, size = 0x2000, scoped, tag = 'input window, operand 1, single buffered']
    #allocation6 [shape = 's32[1]{0}', space=sflag, size = 0x4, scoped, tag = 'scoped memory for tpu_custom_call.1']
    #allocation7 [shape = 'u8[16384]{0}', space=vmem, size = 0x4000, scoped, tag = 'input window, operand 2, single buffered']
    #allocation8 [shape = 'u8[16384]{0}', space=vmem, size = 0x4000, scoped, tag = 'input window, operand 5, single buffered']
    #allocation9 [shape = 's32[1]{0}', space=sflag, size = 0x4, scoped, tag = 'scoped memory for tpu_custom_call.1']
    #allocation10 [shape = 'u8[16384]{0}', space=vmem, size = 0x4000, scoped, tag = 'input window, operand 6, single buffered']
    #allocation11 [shape = 'u8[8192]{0}', space=vmem, size = 0x2000, scoped, tag = 'output window, operand 0, single buffered']
    #allocation12 [shape = 'u8[2048]{0}', space=vmem, size = 0x800, scoped, tag = 'output window, operand 1, single buffered']
    #allocation13 [shape = 's32[1]{0}', space=sflag, size = 0x4, scoped, tag = 'scoped memory for tpu_custom_call.1']
    %16 = vsyncpa [#allocation3], 0
    %17 = vsyncpa [#allocation6], 0
    %18 = vsyncpa [#allocation9], 0
    %19 = vsyncpa [#allocation4], 0
    %20 = vsyncpa [#allocation13], 0
    // Predicated region
    $region2: #{tpu_custom_call.1} parent=1 // pred_check
      _
    $region3: #{tpu_custom_call.1} parent=1 // pred_check_branch
      %22 = sbr.rel (0) target = $region5
    $region4: #{tpu_custom_call.1} parent=1 // pred_region
      %24 = vsyncadd [#allocation3], 0
      %s25 = sshll.u32 %s0, 4
      %s26 = int_to_ptr.hbm [resolvable:$true] %s25
      %s27 = sshll.u32 [#allocation2], 4
      %s28 = int_to_ptr.vmem [resolvable:$true] %s27
      %33 = dma.hbm_to_vmem [thread:$0]  %s26, 256, %s28, [#allocation3], 32, 32, 2
    $region5: #{tpu_custom_call.1} parent=1 // pred_fallthru
      _
    // Predicated region
    $region6: #{tpu_custom_call.1} parent=1 // pred_check
      _
    $region7: #{tpu_custom_call.1} parent=1 // pred_check_branch
      %35 = sbr.rel (0) target = $region9
    $region8: #{tpu_custom_call.1} parent=1 // pred_region
      %37 = vsyncadd [#allocation6], 0
      %s38 = sshll.u32 %s1, 4
      %s39 = int_to_ptr.hbm [resolvable:$true] %s38
      %s40 = sshll.u32 [#allocation5], 4
      %s41 = int_to_ptr.vmem [resolvable:$true] %s40
      %46 = dma.hbm_to_vmem [thread:$0]  %s39, 256, %s41, [#allocation6], 128, 128, 8
    $region9: #{tpu_custom_call.1} parent=1 // pred_fallthru
      _
    // Predicated region
    $region10: #{tpu_custom_call.1} parent=1 // pred_check
      _
    $region11: #{tpu_custom_call.1} parent=1 // pred_check_branch
      %48 = sbr.rel (0) target = $region13
    $region12: #{tpu_custom_call.1} parent=1 // pred_region
      %50 = vsyncadd [#allocation6], 0
      %s51 = sshll.u32 %s2, 4
      %s52 = int_to_ptr.hbm [resolvable:$true] %s51
      %s53 = sshll.u32 [#allocation7], 4
      %s54 = int_to_ptr.vmem [resolvable:$true] %s53
      %59 = dma.hbm_to_vmem [thread:$0]  %s52, 512, %s54, [#allocation6], 128, 128, 8
    $region13: #{tpu_custom_call.1} parent=1 // pred_fallthru
      _
    // Predicated region
    $region14: #{tpu_custom_call.1} parent=1 // pred_check
      _
    $region15: #{tpu_custom_call.1} parent=1 // pred_check_branch
      %61 = sbr.rel (0) target = $region17
    $region16: #{tpu_custom_call.1} parent=1 // pred_region
      _
    $region17: #{tpu_custom_call.1} parent=1 // pred_fallthru
      _
    // Predicated region
    $region18: #{tpu_custom_call.1} parent=1 // pred_check
      _
    $region19: #{tpu_custom_call.1} parent=1 // pred_check_branch
      %63 = sbr.rel (0) target = $region21
    $region20: #{tpu_custom_call.1} parent=1 // pred_region
      _
    $region21: #{tpu_custom_call.1} parent=1 // pred_fallthru
      _
    // Predicated region
    $region22: #{tpu_custom_call.1} parent=1 // pred_check
      _
    $region23: #{tpu_custom_call.1} parent=1 // pred_check_branch
      %65 = sbr.rel (0) target = $region25
    $region24: #{tpu_custom_call.1} parent=1 // pred_region
      %67 = vsyncadd [#allocation9], 0
      %s68 = sshll.u32 %s5, 4
      %s69 = int_to_ptr.hbm [resolvable:$true] %s68
      %s70 = sshll.u32 [#allocation8], 4
      %s71 = int_to_ptr.vmem [resolvable:$true] %s70
      %76 = dma.hbm_to_vmem [thread:$0]  %s69, 512, %s71, [#allocation9], 128, 128, 8
    $region25: #{tpu_custom_call.1} parent=1 // pred_fallthru
      _
    // Predicated region
    $region26: #{tpu_custom_call.1} parent=1 // pred_check
      _
    $region27: #{tpu_custom_call.1} parent=1 // pred_check_branch
      %78 = sbr.rel (0) target = $region29
    $region28: #{tpu_custom_call.1} parent=1 // pred_region
      %80 = vsyncadd [#allocation9], 0
      %s81 = sshll.u32 %s6, 4
      %s82 = int_to_ptr.hbm [resolvable:$true] %s81
      %s83 = sshll.u32 [#allocation10], 4
      %s84 = int_to_ptr.vmem [resolvable:$true] %s83
      %89 = dma.hbm_to_vmem [thread:$0]  %s82, 512, %s84, [#allocation9], 128, 128, 8
    $region29: #{tpu_custom_call.1} parent=1 // pred_fallthru
      _
    // Predicated region
    $region30: #{tpu_custom_call.1} parent=1 // pred_check
      _
    $region31: #{tpu_custom_call.1} parent=1 // pred_check_branch
      %91 = sbr.rel (0) target = $region33
    $region32: #{tpu_custom_call.1} parent=1 // pred_region
      _
    $region33: #{tpu_custom_call.1} parent=1 // pred_fallthru
      _
    // Predicated region
    $region34: #{tpu_custom_call.1} parent=1 // pred_check
      _
    $region35: #{tpu_custom_call.1} parent=1 // pred_check_branch
      %93 = sbr.rel (0) target = $region37
    $region36: #{tpu_custom_call.1} parent=1 // pred_region
      _
    $region37: #{tpu_custom_call.1} parent=1 // pred_fallthru
      _
    // Predicated region
    $region38: #{tpu_custom_call.1} parent=1 // pred_check
      _
    $region39: #{tpu_custom_call.1} parent=1 // pred_check_branch
      %95 = sbr.rel (0) target = $region41
    $region40: #{tpu_custom_call.1} parent=1 // pred_region
      %97 = dma.done [#allocation3], 256
    $region41: #{tpu_custom_call.1} parent=1 // pred_fallthru
      _
    // Predicated region
    $region42: #{tpu_custom_call.1} parent=1 // pred_check
      _
    $region43: #{tpu_custom_call.1} parent=1 // pred_check_branch
      %99 = sbr.rel (0) target = $region45
    $region44: #{tpu_custom_call.1} parent=1 // pred_region
      %101 = dma.done [#allocation6], 256
    $region45: #{tpu_custom_call.1} parent=1 // pred_fallthru
      _
    // Predicated region
    $region46: #{tpu_custom_call.1} parent=1 // pred_check
      _
    $region47: #{tpu_custom_call.1} parent=1 // pred_check_branch
      %103 = sbr.rel (0) target = $region49
    $region48: #{tpu_custom_call.1} parent=1 // pred_region
      %105 = dma.done [#allocation6], 512
    $region49: #{tpu_custom_call.1} parent=1 // pred_fallthru
      _
    // Predicated region
    $region50: #{tpu_custom_call.1} parent=1 // pred_check
      _
    $region51: #{tpu_custom_call.1} parent=1 // pred_check_branch
      %107 = sbr.rel (0) target = $region53
    $region52: #{tpu_custom_call.1} parent=1 // pred_region
      %109 = dma.done [#allocation9], 512
    $region53: #{tpu_custom_call.1} parent=1 // pred_fallthru
      _
    // Predicated region
    $region54: #{tpu_custom_call.1} parent=1 // pred_check
      _
    $region55: #{tpu_custom_call.1} parent=1 // pred_check_branch
      %111 = sbr.rel (0) target = $region57
    $region56: #{tpu_custom_call.1} parent=1 // pred_region
      %113 = dma.done [#allocation9], 512
    $region57: #{tpu_custom_call.1} parent=1 // pred_fallthru
      _
    %v114 = vld [vmem:[%s3] sm:$0x1]
    %v115 = vld [vmem:[%s4] sm:$0x1]
    %v116 = vld [vmem:[%s7] sm:$0x1]
    %v117 = vld [vmem:[%s8] sm:$0x1]
    %v118 = vadd.f32 %v114, %v115
    %vm119 = vcmask 523264
    %v120 = vsel %vm119, %v118, %v114
    %v121 = vadd.f32 %v116, %v117
    %v122 = vsel %vm119, %v121, %v116
    %v123 = vld [vmem:[#allocation2] sm:$0x3]
    %v124 = vld [vmem:[#allocation2 + $0x2] sm:$0x3]
    %v125 = vld [vmem:[#allocation2 + $0x4] sm:$0x3]
    %v126 = vld [vmem:[#allocation2 + $0x6] sm:$0x3]
    %v127 = vld [vmem:[#allocation2 + $0x8] sm:$0x3]
    %v128 = vld [vmem:[#allocation2 + $0xa] sm:$0x3]
    %v129 = vld [vmem:[#allocation2 + $0xc] sm:$0x3]
    %v130 = vld [vmem:[#allocation2 + $0xe] sm:$0x3]
    %v131 = vld [vmem:[#allocation5] sm:$0xff]
    %v132 = vld [vmem:[#allocation5 + $0x8] sm:$0xff]
    %v133 = vperm.slane %v120, 0
    %142 = vst [vmem:[#allocation1] ss:$4 sm:$0xff] %v123
    %s143 = scalar_lea.vmem [#allocation1], 1
    %144 = vst [vmem:[%s143] ss:$4 sm:$0xff] %v124
    %s145 = scalar_lea.vmem [#allocation1], 2
    %146 = vst [vmem:[%s145] ss:$4 sm:$0xff] %v125
    %s147 = scalar_lea.vmem [#allocation1], 3
    %148 = vst [vmem:[%s147] ss:$4 sm:$0xff] %v126
    %s149 = scalar_lea.vmem [#allocation1], 32
    %150 = vst [vmem:[%s149] ss:$4 sm:$0xff] %v127
    %s151 = scalar_lea.vmem [#allocation1], 33
    %152 = vst [vmem:[%s151] ss:$4 sm:$0xff] %v128
    %s153 = scalar_lea.vmem [#allocation1], 34
    %154 = vst [vmem:[%s153] ss:$4 sm:$0xff] %v129
    %s155 = scalar_lea.vmem [#allocation1], 35
    %156 = vst [vmem:[%s155] ss:$4 sm:$0xff] %v130
    %v157 = vld.sshfl [vmem:[#allocation1] sm:$0xff pattern:$0x73625140]
    %v158 = vld.sshfl [vmem:[#allocation1 + $0x20] sm:$0xff pattern:$0x73625140]
    %vm159 = vcmask 130048
    %v160 = vsel %vm159, %v157, 0
    %v162 = vsel %vm159, %v158, 0
    %164 = vmatpush.msra.mxu0 0.0
    %165 = vmatpush.msra.mxu0 0.0
    %166 = vmatpush.msra.mxu0 0.0
    %167 = vmatpush.msra.mxu0 0.0
    %168 = vmatpush.msra.mxu0 0.0
    %169 = vmatpush.msra.mxu0 0.0
    %170 = vmatpush.msra.mxu0 0.0
    %171 = vmatpush.msra.mxu0 0.0
    %172 = vmatpush.msra.mxu0 0.0
    %173 = vmatpush.msra.mxu0 0.0
    %174 = vmatpush.msra.mxu0 0.0
    %175 = vmatpush.msra.mxu0 0.0
    %176 = vmatpush.msra.mxu0 0.0
    %177 = vmatpush.msra.mxu0 0.0
    %178 = vmatpush.msra.mxu0 %v132
    %179 = vmatpush.msra.mxu0 %v131
    %180 = vmatmul.f32.gmra.mxu0 %v160
    %v181 = vpop.f32.mrf.mxu0
    %v182 = vadd.f32 %v133, %v181
    %183 = vmatmul.f32.gmra.mxu0 %v162
    %v184 = vpop.f32.mrf.mxu0
    %v185 = vadd.f32 %v133, %v184
    %186 = vdwg.mxu0
    %v187 = vld [vmem:[#allocation7] sm:$0xff]
    %v188 = vld [vmem:[#allocation7 + $0x8] sm:$0xff]
    %v189 = vld [vmem:[#allocation7 + $0x10] sm:$0xff]
    %v190 = vld [vmem:[#allocation7 + $0x18] sm:$0xff]
    %v191 = vld [vmem:[#allocation8] sm:$0xff]
    %v192 = vld [vmem:[#allocation8 + $0x8] sm:$0xff]
    %v193 = vld [vmem:[#allocation8 + $0x10] sm:$0xff]
    %v194 = vld [vmem:[#allocation8 + $0x18] sm:$0xff]
    %199 = vrot.lane.b32.xlu0 %v191, 96
    %v200 = vpop.permute.xlu0 %199
    %201 = vrot.lane.b32.xlu0 %v192, 96
    %v202 = vpop.permute.xlu0 %201
    %203 = vrot.lane.b32.xlu0 %v193, 96
    %v204 = vpop.permute.xlu0 %203
    %205 = vrot.lane.b32.xlu0 %v194, 96
    %v206 = vpop.permute.xlu0 %205
    %vm211 = vcmask 785408
    %v212 = vsel %vm211, %v187, %v200
    %v213 = vsel %vm211, %v188, %v202
    %v214 = vsel %vm211, %v189, %v204
    %v215 = vsel %vm211, %v190, %v206
    %v216 = vsel %vm119, %v200, 0.0
    %v217 = vsel %vm119, %v202, 0.0
    %v218 = vsel %vm119, %v204, 0.0
    %v219 = vsel %vm119, %v206, 0.0
    %v220 = vld [vmem:[#allocation10] sm:$0xff]
    %v221 = vld [vmem:[#allocation10 + $0x8] sm:$0xff]
    %v222 = vld [vmem:[#allocation10 + $0x10] sm:$0xff]
    %v223 = vld [vmem:[#allocation10 + $0x18] sm:$0xff]
    %228 = vrot.lane.b32.xlu0 %v220, 64
    %v229 = vpop.permute.xlu0 %228
    %230 = vrot.lane.b32.xlu0 %v221, 64
    %v231 = vpop.permute.xlu0 %230
    %232 = vrot.lane.b32.xlu0 %v222, 64
    %v233 = vpop.permute.xlu0 %232
    %234 = vrot.lane.b32.xlu0 %v223, 64
    %v235 = vpop.permute.xlu0 %234
    %v240 = vsel %vm119, 0.0, %v229
    %v241 = vsel %vm119, 0.0, %v231
    %v242 = vsel %vm119, 0.0, %v233
    %v243 = vsel %vm119, 0.0, %v235
    %v244 = vadd.f32 %v182, 0.0
    %v245 = vxor.u32 %v244, 2147483648
    %v246 = vmul.f32 %v245, 1.442695
    %v247 = vpow.pop %v246
    %v248 = vadd.f32 %v247, 1.0
    %v249 = vrcp.pop %v248
    %v250 = vmul.f32 %v248, %v249
    %v251 = vsub.f32 1.0, %v250
    %v252 = vmul.f32 %v249, %v251
    %v253 = vadd.f32 %v249, %v252
    %vm254 = vweird.f32 %v248
    %vm255 = vweird.f32 %v249
    %vm256 = vmor %vm254, %vm255
    %v257 = vsel %vm256, %v249, %v253
    %v258 = vand.u32 2147483647, %v248
    %vm259 = vcmp.eq.f32.partialorder %v258, 8.507059e+37
    %v260 = vand.u32 %v248, 2147483648
    %v261 = vor.u32 1.1754944e-38, %v260
    %v262 = vsel %vm259, %v261, %v257
    %v263 = vmul.f32 1.0, %v262
    %v265 = vperm.slane %v115, 0
    %v267 = vadd.f32 %v265, 0.0
    %269 = vrot.lane.b32.xlu0 %v267, 64
    %v270 = vpop.permute.xlu0 %269
    %v272 = vmul.f32 %v263, %v270
    %274 = vrot.lane.b32.xlu0 %v272, 64
    %v275 = vpop.permute.xlu0 %274
    %v277 = vadd.f32 %v182, %v275
    %v278 = vtanh.pop %v277
    %v279 = vsub.f32 1.0, %v263
    %281 = vrot.lane.b32.xlu0 %v278, 96
    %v282 = vpop.permute.xlu0 %281
    %v284 = vmul.f32 %v279, %v282
    %v285 = vmul.f32 %v263, 0.0
    %v286 = vadd.f32 %v284, %v285
    %288 = vrot.lane.b32.xlu0 %v286, 96
    %v289 = vpop.permute.xlu0 %288
    %vm291 = vcmask 261120
    %v292 = vsel %vm291, %v289, 0.0
    %v294 = vsel %vm119, %v292, 0
    %296 = vmatpush.msra.mxu0 0.0
    %297 = vmatpush.msra.mxu0 0.0
    %298 = vmatpush.msra.mxu0 0.0
    %299 = vmatpush.msra.mxu0 0.0
    %300 = vmatpush.msra.mxu0 0.0
    %301 = vmatpush.msra.mxu0 0.0
    %302 = vmatpush.msra.mxu0 0.0
    %303 = vmatpush.msra.mxu0 0.0
    %304 = vmatpush.msra.mxu0 0.0
    %305 = vmatpush.msra.mxu0 0.0
    %306 = vmatpush.msra.mxu0 0.0
    %307 = vmatpush.msra.mxu0 0.0
    %308 = vmatpush.msra.mxu0 %v215
    %309 = vmatpush.msra.mxu0 %v214
    %310 = vmatpush.msra.mxu0 %v213
    %311 = vmatpush.msra.mxu0 %v212
    %312 = vmatmul.f32.gmra.mxu0 %v294
    %v313 = vpop.f32.mrf.mxu0
    %v314 = vadd.f32 0.0, %v313
    %315 = vdwg.mxu0
    %316 = vmatpush.msra.mxu0 0.0
    %317 = vmatpush.msra.mxu0 0.0
    %318 = vmatpush.msra.mxu0 0.0
    %319 = vmatpush.msra.mxu0 0.0
    %320 = vmatpush.msra.mxu0 0.0
    %321 = vmatpush.msra.mxu0 0.0
    %322 = vmatpush.msra.mxu0 0.0
    %323 = vmatpush.msra.mxu0 0.0
    %324 = vmatpush.msra.mxu0 %v243
    %325 = vmatpush.msra.mxu0 %v242
    %326 = vmatpush.msra.mxu0 %v241
    %327 = vmatpush.msra.mxu0 %v240
    %328 = vmatpush.msra.mxu0 %v219
    %329 = vmatpush.msra.mxu0 %v218
    %330 = vmatpush.msra.mxu0 %v217
    %331 = vmatpush.msra.mxu0 %v216
    %332 = vmatmul.f32.gmra.mxu0 %v294
    %v333 = vpop.f32.mrf.mxu0
    %v334 = vadd.f32 0.0, %v333
    %335 = vdwg.mxu0
    %336 = vmatpush.msra.mxu0 0.0
    %337 = vmatpush.msra.mxu0 0.0
    %338 = vmatpush.msra.mxu0 0.0
    %339 = vmatpush.msra.mxu0 0.0
    %340 = vmatpush.msra.mxu0 0.0
    %341 = vmatpush.msra.mxu0 0.0
    %342 = vmatpush.msra.mxu0 0.0
    %343 = vmatpush.msra.mxu0 0.0
    %344 = vmatpush.msra.mxu0 %v235
    %345 = vmatpush.msra.mxu0 %v233
    %346 = vmatpush.msra.mxu0 %v231
    %347 = vmatpush.msra.mxu0 %v229
    %348 = vmatpush.msra.mxu0 0.0
    %349 = vmatpush.msra.mxu0 0.0
    %350 = vmatpush.msra.mxu0 0.0
    %351 = vmatpush.msra.mxu0 0.0
    %352 = vmatmul.f32.gmra.mxu0 %v294
    %v353 = vpop.f32.mrf.mxu0
    %v354 = vadd.f32 0.0, %v353
    %355 = vdwg.mxu0
    %v357 = vrot.slane %v314, 6
    %v359 = vadd.f32 %v182, %v357
    %v360 = vxor.u32 %v359, 2147483648
    %v361 = vmul.f32 %v360, 1.442695
    %v362 = vpow.pop %v361
    %v363 = vadd.f32 %v362, 1.0
    %v364 = vrcp.pop %v363
    %v365 = vmul.f32 %v363, %v364
    %v366 = vsub.f32 1.0, %v365
    %v367 = vmul.f32 %v364, %v366
    %v368 = vadd.f32 %v364, %v367
    %vm369 = vweird.f32 %v363
    %vm370 = vweird.f32 %v364
    %vm371 = vmor %vm369, %vm370
    %v372 = vsel %vm371, %v364, %v368
    %v373 = vand.u32 2147483647, %v363
    %vm374 = vcmp.eq.f32.partialorder %v373, 8.507059e+37
    %v375 = vand.u32 %v363, 2147483648
    %v376 = vor.u32 1.1754944e-38, %v375
    %v377 = vsel %vm374, %v376, %v372
    %v378 = vmul.f32 1.0, %v377
    %v379 = vadd.f32 %v314, %v265
    %v381 = vrot.slane %v379, 6
    %382 = vrot.lane.b32.xlu0 %v381, 64
    %v383 = vpop.permute.xlu0 %382
    %v385 = vmul.f32 %v378, %v383
    %387 = vrot.lane.b32.xlu0 %v385, 64
    %v388 = vpop.permute.xlu0 %387
    %v390 = vadd.f32 %v182, %v388
    %v391 = vtanh.pop %v390
    %v392 = vsub.f32 1.0, %v378
    %394 = vrot.lane.b32.xlu0 %v391, 96
    %v395 = vpop.permute.xlu0 %394
    %v397 = vmul.f32 %v392, %v395
    %v398 = vrot.slane %v286, 6
    %v400 = vmul.f32 %v378, %v398
    %v401 = vadd.f32 %v397, %v400
    %v402 = vperm.slane %v122, 0
    %404 = vrot.lane.b32.xlu0 %v402, 96
    %v405 = vpop.permute.xlu0 %404
    %v407 = vadd.f32 %v314, %v405
    %v408 = vadd.f32 %v334, %v405
    %410 = vrot.lane.b32.xlu0 %v334, 32
    %v411 = vpop.permute.xlu0 %410
    %v413 = vadd.f32 %v407, %v411
    %v414 = vxor.u32 %v413, 2147483648
    %v415 = vmul.f32 %v414, 1.442695
    %v416 = vpow.pop %v415
    %v417 = vadd.f32 %v416, 1.0
    %v418 = vrcp.pop %v417
    %v419 = vmul.f32 %v417, %v418
    %v420 = vsub.f32 1.0, %v419
    %v421 = vmul.f32 %v418, %v420
    %v422 = vadd.f32 %v418, %v421
    %vm423 = vweird.f32 %v417
    %vm424 = vweird.f32 %v418
    %vm425 = vmor %vm423, %vm424
    %v426 = vsel %vm425, %v418, %v422
    %v427 = vand.u32 2147483647, %v417
    %vm428 = vcmp.eq.f32.partialorder %v427, 8.507059e+37
    %v429 = vand.u32 %v417, 2147483648
    %v430 = vor.u32 1.1754944e-38, %v429
    %v431 = vsel %vm428, %v430, %v426
    %v432 = vmul.f32 1.0, %v431
    %v433 = vadd.f32 %v408, %v411
    %v434 = vxor.u32 %v433, 2147483648
    %v435 = vmul.f32 %v434, 1.442695
    %v436 = vpow.pop %v435
    %v437 = vadd.f32 %v436, 1.0
    %v438 = vrcp.pop %v437
    %v439 = vmul.f32 %v437, %v438
    %v440 = vsub.f32 1.0, %v439
    %v441 = vmul.f32 %v438, %v440
    %v442 = vadd.f32 %v438, %v441
    %vm443 = vweird.f32 %v437
    %vm444 = vweird.f32 %v438
    %vm445 = vmor %vm443, %vm444
    %v446 = vsel %vm445, %v438, %v442
    %v447 = vand.u32 2147483647, %v437
    %vm448 = vcmp.eq.f32.partialorder %v447, 8.507059e+37
    %v449 = vand.u32 %v437, 2147483648
    %v450 = vor.u32 1.1754944e-38, %v449
    %v451 = vsel %vm448, %v450, %v446
    %v452 = vmul.f32 1.0, %v451
    %v454 = vperm.slane %v117, 0
    %455 = vrot.lane.b32.xlu0 %v454, 64
    %v456 = vpop.permute.xlu0 %455
    %v458 = vadd.f32 %v354, %v456
    %460 = vrot.lane.b32.xlu0 %v458, 96
    %v461 = vpop.permute.xlu0 %460
    %v463 = vmul.f32 %v432, %v461
    %465 = vrot.lane.b32.xlu0 %v463, 64
    %v466 = vpop.permute.xlu0 %465
    %v468 = vadd.f32 %v408, %v466
    %v469 = vtanh.pop %v468
    %v470 = vsub.f32 1.0, %v452
    %472 = vrot.lane.b32.xlu0 %v469, 96
    %v473 = vpop.permute.xlu0 %472
    %v475 = vmul.f32 %v470, %v473
    %v476 = vmul.f32 %v452, 0.0
    %v477 = vadd.f32 %v475, %v476
    %v479 = vrot.slane %v477, 1
    %vm481 = vcmask 253952
    %482 = vst.msk [vmem:[#allocation11] sm:$0x1] %vm481, %v477
    %483 = vst.msk [vmem:[#allocation11 + $0x8] sm:$0x1] %vm481, %v479
    %485 = vrot.lane.b32.xlu0 %v401, 96
    %v486 = vpop.permute.xlu0 %485
    %v488 = vrot.slane %v477, 6
    %489 = vrot.lane.b32.xlu0 %v488, 32
    %v490 = vpop.permute.xlu0 %489
    %v492 = vsel %vm291, %v486, %v490
    %v494 = vrot.slane %v492, 2
    %v495 = vsel %vm119, %v494, 0
    %497 = vmatpush.msra.mxu0 0.0
    %498 = vmatpush.msra.mxu0 0.0
    %499 = vmatpush.msra.mxu0 0.0
    %500 = vmatpush.msra.mxu0 0.0
    %501 = vmatpush.msra.mxu0 0.0
    %502 = vmatpush.msra.mxu0 0.0
    %503 = vmatpush.msra.mxu0 0.0
    %504 = vmatpush.msra.mxu0 0.0
    %505 = vmatpush.msra.mxu0 0.0
    %506 = vmatpush.msra.mxu0 0.0
    %507 = vmatpush.msra.mxu0 0.0
    %508 = vmatpush.msra.mxu0 0.0
    %509 = vmatpush.msra.mxu0 %v215
    %510 = vmatpush.msra.mxu0 %v214
    %511 = vmatpush.msra.mxu0 %v213
    %512 = vmatpush.msra.mxu0 %v212
    %513 = vmatmul.f32.gmra.mxu0 %v495
    %v514 = vpop.f32.mrf.mxu0
    %v515 = vadd.f32 0.0, %v514
    %516 = vdwg.mxu0
    %517 = vmatpush.msra.mxu0 0.0
    %518 = vmatpush.msra.mxu0 0.0
    %519 = vmatpush.msra.mxu0 0.0
    %520 = vmatpush.msra.mxu0 0.0
    %521 = vmatpush.msra.mxu0 0.0
    %522 = vmatpush.msra.mxu0 0.0
    %523 = vmatpush.msra.mxu0 0.0
    %524 = vmatpush.msra.mxu0 0.0
    %525 = vmatpush.msra.mxu0 %v243
    %526 = vmatpush.msra.mxu0 %v242
    %527 = vmatpush.msra.mxu0 %v241
    %528 = vmatpush.msra.mxu0 %v240
    %529 = vmatpush.msra.mxu0 %v219
    %530 = vmatpush.msra.mxu0 %v218
    %531 = vmatpush.msra.mxu0 %v217
    %532 = vmatpush.msra.mxu0 %v216
    %533 = vmatmul.f32.gmra.mxu0 %v495
    %v534 = vpop.f32.mrf.mxu0
    %v535 = vadd.f32 0.0, %v534
    %536 = vdwg.mxu0
    %537 = vmatpush.msra.mxu0 0.0
    %538 = vmatpush.msra.mxu0 0.0
    %539 = vmatpush.msra.mxu0 0.0
    %540 = vmatpush.msra.mxu0 0.0
    %541 = vmatpush.msra.mxu0 0.0
    %542 = vmatpush.msra.mxu0 0.0
    %543 = vmatpush.msra.mxu0 0.0
    %544 = vmatpush.msra.mxu0 0.0
    %545 = vmatpush.msra.mxu0 %v235
    %546 = vmatpush.msra.mxu0 %v233
    %547 = vmatpush.msra.mxu0 %v231
    %548 = vmatpush.msra.mxu0 %v229
    %549 = vmatpush.msra.mxu0 0.0
    %550 = vmatpush.msra.mxu0 0.0
    %551 = vmatpush.msra.mxu0 0.0
    %552 = vmatpush.msra.mxu0 0.0
    %553 = vmatmul.f32.gmra.mxu0 %v495
    %v554 = vpop.f32.mrf.mxu0
    %v555 = vadd.f32 0.0, %v554
    %556 = vdwg.mxu0
    %v558 = vrot.slane %v515, 4
    %v560 = vadd.f32 %v182, %v558
    %v561 = vxor.u32 %v560, 2147483648
    %v562 = vmul.f32 %v561, 1.442695
    %v563 = vpow.pop %v562
    %v564 = vadd.f32 %v563, 1.0
    %v565 = vrcp.pop %v564
    %v566 = vmul.f32 %v564, %v565
    %v567 = vsub.f32 1.0, %v566
    %v568 = vmul.f32 %v565, %v567
    %v569 = vadd.f32 %v565, %v568
    %vm570 = vweird.f32 %v564
    %vm571 = vweird.f32 %v565
    %vm572 = vmor %vm570, %vm571
    %v573 = vsel %vm572, %v565, %v569
    %v574 = vand.u32 2147483647, %v564
    %vm575 = vcmp.eq.f32.partialorder %v574, 8.507059e+37
    %v576 = vand.u32 %v564, 2147483648
    %v577 = vor.u32 1.1754944e-38, %v576
    %v578 = vsel %vm575, %v577, %v573
    %v579 = vmul.f32 1.0, %v578
    %v580 = vadd.f32 %v515, %v265
    %v582 = vrot.slane %v580, 4
    %583 = vrot.lane.b32.xlu0 %v582, 64
    %v584 = vpop.permute.xlu0 %583
    %v586 = vmul.f32 %v579, %v584
    %588 = vrot.lane.b32.xlu0 %v586, 64
    %v589 = vpop.permute.xlu0 %588
    %v591 = vadd.f32 %v182, %v589
    %v592 = vtanh.pop %v591
    %v593 = vsub.f32 1.0, %v579
    %595 = vrot.lane.b32.xlu0 %v592, 96
    %v596 = vpop.permute.xlu0 %595
    %v598 = vmul.f32 %v593, %v596
    %v599 = vrot.slane %v401, 6
    %v601 = vmul.f32 %v579, %v599
    %v602 = vadd.f32 %v598, %v601
    %v603 = vadd.f32 %v515, %v405
    %v604 = vadd.f32 %v535, %v405
    %606 = vrot.lane.b32.xlu0 %v535, 32
    %v607 = vpop.permute.xlu0 %606
    %v609 = vadd.f32 %v603, %v607
    %v610 = vxor.u32 %v609, 2147483648
    %v611 = vmul.f32 %v610, 1.442695
    %v612 = vpow.pop %v611
    %v613 = vadd.f32 %v612, 1.0
    %v614 = vrcp.pop %v613
    %v615 = vmul.f32 %v613, %v614
    %v616 = vsub.f32 1.0, %v615
    %v617 = vmul.f32 %v614, %v616
    %v618 = vadd.f32 %v614, %v617
    %vm619 = vweird.f32 %v613
    %vm620 = vweird.f32 %v614
    %vm621 = vmor %vm619, %vm620
    %v622 = vsel %vm621, %v614, %v618
    %v623 = vand.u32 2147483647, %v613
    %vm624 = vcmp.eq.f32.partialorder %v623, 8.507059e+37
    %v625 = vand.u32 %v613, 2147483648
    %v626 = vor.u32 1.1754944e-38, %v625
    %v627 = vsel %vm624, %v626, %v622
    %v628 = vmul.f32 1.0, %v627
    %v629 = vadd.f32 %v604, %v607
    %v630 = vxor.u32 %v629, 2147483648
    %v631 = vmul.f32 %v630, 1.442695
    %v632 = vpow.pop %v631
    %v633 = vadd.f32 %v632, 1.0
    %v634 = vrcp.pop %v633
    %v635 = vmul.f32 %v633, %v634
    %v636 = vsub.f32 1.0, %v635
    %v637 = vmul.f32 %v634, %v636
    %v638 = vadd.f32 %v634, %v637
    %vm639 = vweird.f32 %v633
    %vm640 = vweird.f32 %v634
    %vm641 = vmor %vm639, %vm640
    %v642 = vsel %vm641, %v634, %v638
    %v643 = vand.u32 2147483647, %v633
    %vm644 = vcmp.eq.f32.partialorder %v643, 8.507059e+37
    %v645 = vand.u32 %v633, 2147483648
    %v646 = vor.u32 1.1754944e-38, %v645
    %v647 = vsel %vm644, %v646, %v642
    %v648 = vmul.f32 1.0, %v647
    %v649 = vadd.f32 %v555, %v456
    %651 = vrot.lane.b32.xlu0 %v649, 96
    %v652 = vpop.permute.xlu0 %651
    %v654 = vmul.f32 %v628, %v652
    %656 = vrot.lane.b32.xlu0 %v654, 64
    %v657 = vpop.permute.xlu0 %656
    %v659 = vadd.f32 %v604, %v657
    %v660 = vtanh.pop %v659
    %v661 = vsub.f32 1.0, %v648
    %663 = vrot.lane.b32.xlu0 %v660, 96
    %v664 = vpop.permute.xlu0 %663
    %v666 = vmul.f32 %v661, %v664
    %v667 = vmul.f32 %v648, %v477
    %v668 = vadd.f32 %v666, %v667
    %v670 = vrot.slane %v668, 1
    %672 = vst.msk [vmem:[#allocation11 + $0x1] sm:$0x1] %vm481, %v668
    %673 = vst.msk [vmem:[#allocation11 + $0x9] sm:$0x1] %vm481, %v670
    %675 = vrot.lane.b32.xlu0 %v602, 96
    %v676 = vpop.permute.xlu0 %675
    %v678 = vrot.slane %v668, 4
    %679 = vrot.lane.b32.xlu0 %v678, 32
    %v680 = vpop.permute.xlu0 %679
    %v682 = vsel %vm291, %v676, %v680
    %v684 = vrot.slane %v682, 4
    %v685 = vsel %vm119, %v684, 0
    %687 = vmatpush.msra.mxu0 0.0
    %688 = vmatpush.msra.mxu0 0.0
    %689 = vmatpush.msra.mxu0 0.0
    %690 = vmatpush.msra.mxu0 0.0
    %691 = vmatpush.msra.mxu0 0.0
    %692 = vmatpush.msra.mxu0 0.0
    %693 = vmatpush.msra.mxu0 0.0
    %694 = vmatpush.msra.mxu0 0.0
    %695 = vmatpush.msra.mxu0 0.0
    %696 = vmatpush.msra.mxu0 0.0
    %697 = vmatpush.msra.mxu0 0.0
    %698 = vmatpush.msra.mxu0 0.0
    %699 = vmatpush.msra.mxu0 %v215
    %700 = vmatpush.msra.mxu0 %v214
    %701 = vmatpush.msra.mxu0 %v213
    %702 = vmatpush.msra.mxu0 %v212
    %703 = vmatmul.f32.gmra.mxu0 %v685
    %v704 = vpop.f32.mrf.mxu0
    %v705 = vadd.f32 0.0, %v704
    %706 = vdwg.mxu0
    %707 = vmatpush.msra.mxu0 0.0
    %708 = vmatpush.msra.mxu0 0.0
    %709 = vmatpush.msra.mxu0 0.0
    %710 = vmatpush.msra.mxu0 0.0
    %711 = vmatpush.msra.mxu0 0.0
    %712 = vmatpush.msra.mxu0 0.0
    %713 = vmatpush.msra.mxu0 0.0
    %714 = vmatpush.msra.mxu0 0.0
    %715 = vmatpush.msra.mxu0 %v243
    %716 = vmatpush.msra.mxu0 %v242
    %717 = vmatpush.msra.mxu0 %v241
    %718 = vmatpush.msra.mxu0 %v240
    %719 = vmatpush.msra.mxu0 %v219
    %720 = vmatpush.msra.mxu0 %v218
    %721 = vmatpush.msra.mxu0 %v217
    %722 = vmatpush.msra.mxu0 %v216
    %723 = vmatmul.f32.gmra.mxu0 %v685
    %v724 = vpop.f32.mrf.mxu0
    %v725 = vadd.f32 0.0, %v724
    %726 = vdwg.mxu0
    %727 = vmatpush.msra.mxu0 0.0
    %728 = vmatpush.msra.mxu0 0.0
    %729 = vmatpush.msra.mxu0 0.0
    %730 = vmatpush.msra.mxu0 0.0
    %731 = vmatpush.msra.mxu0 0.0
    %732 = vmatpush.msra.mxu0 0.0
    %733 = vmatpush.msra.mxu0 0.0
    %734 = vmatpush.msra.mxu0 0.0
    %735 = vmatpush.msra.mxu0 %v235
    %736 = vmatpush.msra.mxu0 %v233
    %737 = vmatpush.msra.mxu0 %v231
    %738 = vmatpush.msra.mxu0 %v229
    %739 = vmatpush.msra.mxu0 0.0
    %740 = vmatpush.msra.mxu0 0.0
    %741 = vmatpush.msra.mxu0 0.0
    %742 = vmatpush.msra.mxu0 0.0
    %743 = vmatmul.f32.gmra.mxu0 %v685
    %v744 = vpop.f32.mrf.mxu0
    %v745 = vadd.f32 0.0, %v744
    %746 = vdwg.mxu0
    %v748 = vrot.slane %v705, 2
    %v750 = vadd.f32 %v182, %v748
    %v751 = vxor.u32 %v750, 2147483648
    %v752 = vmul.f32 %v751, 1.442695
    %v753 = vpow.pop %v752
    %v754 = vadd.f32 %v753, 1.0
    %v755 = vrcp.pop %v754
    %v756 = vmul.f32 %v754, %v755
    %v757 = vsub.f32 1.0, %v756
    %v758 = vmul.f32 %v755, %v757
    %v759 = vadd.f32 %v755, %v758
    %vm760 = vweird.f32 %v754
    %vm761 = vweird.f32 %v755
    %vm762 = vmor %vm760, %vm761
    %v763 = vsel %vm762, %v755, %v759
    %v764 = vand.u32 2147483647, %v754
    %vm765 = vcmp.eq.f32.partialorder %v764, 8.507059e+37
    %v766 = vand.u32 %v754, 2147483648
    %v767 = vor.u32 1.1754944e-38, %v766
    %v768 = vsel %vm765, %v767, %v763
    %v769 = vmul.f32 1.0, %v768
    %v770 = vadd.f32 %v705, %v265
    %v772 = vrot.slane %v770, 2
    %773 = vrot.lane.b32.xlu0 %v772, 64
    %v774 = vpop.permute.xlu0 %773
    %v776 = vmul.f32 %v769, %v774
    %778 = vrot.lane.b32.xlu0 %v776, 64
    %v779 = vpop.permute.xlu0 %778
    %v781 = vadd.f32 %v182, %v779
    %v782 = vtanh.pop %v781
    %v783 = vsub.f32 1.0, %v769
    %785 = vrot.lane.b32.xlu0 %v782, 96
    %v786 = vpop.permute.xlu0 %785
    %v788 = vmul.f32 %v783, %v786
    %v789 = vrot.slane %v602, 6
    %v791 = vmul.f32 %v769, %v789
    %v792 = vadd.f32 %v788, %v791
    %v793 = vadd.f32 %v705, %v405
    %v794 = vadd.f32 %v725, %v405
    %796 = vrot.lane.b32.xlu0 %v725, 32
    %v797 = vpop.permute.xlu0 %796
    %v799 = vadd.f32 %v793, %v797
    %v800 = vxor.u32 %v799, 2147483648
    %v801 = vmul.f32 %v800, 1.442695
    %v802 = vpow.pop %v801
    %v803 = vadd.f32 %v802, 1.0
    %v804 = vrcp.pop %v803
    %v805 = vmul.f32 %v803, %v804
    %v806 = vsub.f32 1.0, %v805
    %v807 = vmul.f32 %v804, %v806
    %v808 = vadd.f32 %v804, %v807
    %vm809 = vweird.f32 %v803
    %vm810 = vweird.f32 %v804
    %vm811 = vmor %vm809, %vm810
    %v812 = vsel %vm811, %v804, %v808
    %v813 = vand.u32 2147483647, %v803
    %vm814 = vcmp.eq.f32.partialorder %v813, 8.507059e+37
    %v815 = vand.u32 %v803, 2147483648
    %v816 = vor.u32 1.1754944e-38, %v815
    %v817 = vsel %vm814, %v816, %v812
    %v818 = vmul.f32 1.0, %v817
    %v819 = vadd.f32 %v794, %v797
    %v820 = vxor.u32 %v819, 2147483648
    %v821 = vmul.f32 %v820, 1.442695
    %v822 = vpow.pop %v821
    %v823 = vadd.f32 %v822, 1.0
    %v824 = vrcp.pop %v823
    %v825 = vmul.f32 %v823, %v824
    %v826 = vsub.f32 1.0, %v825
    %v827 = vmul.f32 %v824, %v826
    %v828 = vadd.f32 %v824, %v827
    %vm829 = vweird.f32 %v823
    %vm830 = vweird.f32 %v824
    %vm831 = vmor %vm829, %vm830
    %v832 = vsel %vm831, %v824, %v828
    %v833 = vand.u32 2147483647, %v823
    %vm834 = vcmp.eq.f32.partialorder %v833, 8.507059e+37
    %v835 = vand.u32 %v823, 2147483648
    %v836 = vor.u32 1.1754944e-38, %v835
    %v837 = vsel %vm834, %v836, %v832
    %v838 = vmul.f32 1.0, %v837
    %v839 = vadd.f32 %v745, %v456
    %841 = vrot.lane.b32.xlu0 %v839, 96
    %v842 = vpop.permute.xlu0 %841
    %v844 = vmul.f32 %v818, %v842
    %846 = vrot.lane.b32.xlu0 %v844, 64
    %v847 = vpop.permute.xlu0 %846
    %v849 = vadd.f32 %v794, %v847
    %v850 = vtanh.pop %v849
    %v851 = vsub.f32 1.0, %v838
    %853 = vrot.lane.b32.xlu0 %v850, 96
    %v854 = vpop.permute.xlu0 %853
    %v856 = vmul.f32 %v851, %v854
    %v857 = vmul.f32 %v838, %v668
    %v858 = vadd.f32 %v856, %v857
    %v860 = vrot.slane %v858, 1
    %862 = vst.msk [vmem:[#allocation11 + $0x2] sm:$0x1] %vm481, %v858
    %863 = vst.msk [vmem:[#allocation11 + $0xa] sm:$0x1] %vm481, %v860
    %865 = vrot.lane.b32.xlu0 %v792, 96
    %v866 = vpop.permute.xlu0 %865
    %v868 = vrot.slane %v858, 2
    %869 = vrot.lane.b32.xlu0 %v868, 32
    %v870 = vpop.permute.xlu0 %869
    %v872 = vsel %vm291, %v866, %v870
    %v874 = vrot.slane %v872, 6
    %v875 = vsel %vm119, %v874, 0
    %877 = vmatpush.msra.mxu0 0.0
    %878 = vmatpush.msra.mxu0 0.0
    %879 = vmatpush.msra.mxu0 0.0
    %880 = vmatpush.msra.mxu0 0.0
    %881 = vmatpush.msra.mxu0 0.0
    %882 = vmatpush.msra.mxu0 0.0
    %883 = vmatpush.msra.mxu0 0.0
    %884 = vmatpush.msra.mxu0 0.0
    %885 = vmatpush.msra.mxu0 0.0
    %886 = vmatpush.msra.mxu0 0.0
    %887 = vmatpush.msra.mxu0 0.0
    %888 = vmatpush.msra.mxu0 0.0
    %889 = vmatpush.msra.mxu0 %v215
    %890 = vmatpush.msra.mxu0 %v214
    %891 = vmatpush.msra.mxu0 %v213
    %892 = vmatpush.msra.mxu0 %v212
    %893 = vmatmul.f32.gmra.mxu0 %v875
    %v894 = vpop.f32.mrf.mxu0
    %v895 = vadd.f32 0.0, %v894
    %896 = vdwg.mxu0
    %897 = vmatpush.msra.mxu0 0.0
    %898 = vmatpush.msra.mxu0 0.0
    %899 = vmatpush.msra.mxu0 0.0
    %900 = vmatpush.msra.mxu0 0.0
    %901 = vmatpush.msra.mxu0 0.0
    %902 = vmatpush.msra.mxu0 0.0
    %903 = vmatpush.msra.mxu0 0.0
    %904 = vmatpush.msra.mxu0 0.0
    %905 = vmatpush.msra.mxu0 %v243
    %906 = vmatpush.msra.mxu0 %v242
    %907 = vmatpush.msra.mxu0 %v241
    %908 = vmatpush.msra.mxu0 %v240
    %909 = vmatpush.msra.mxu0 %v219
    %910 = vmatpush.msra.mxu0 %v218
    %911 = vmatpush.msra.mxu0 %v217
    %912 = vmatpush.msra.mxu0 %v216
    %913 = vmatmul.f32.gmra.mxu0 %v875
    %v914 = vpop.f32.mrf.mxu0
    %v915 = vadd.f32 0.0, %v914
    %916 = vdwg.mxu0
    %917 = vmatpush.msra.mxu0 0.0
    %918 = vmatpush.msra.mxu0 0.0
    %919 = vmatpush.msra.mxu0 0.0
    %920 = vmatpush.msra.mxu0 0.0
    %921 = vmatpush.msra.mxu0 0.0
    %922 = vmatpush.msra.mxu0 0.0
    %923 = vmatpush.msra.mxu0 0.0
    %924 = vmatpush.msra.mxu0 0.0
    %925 = vmatpush.msra.mxu0 %v235
    %926 = vmatpush.msra.mxu0 %v233
    %927 = vmatpush.msra.mxu0 %v231
    %928 = vmatpush.msra.mxu0 %v229
    %929 = vmatpush.msra.mxu0 0.0
    %930 = vmatpush.msra.mxu0 0.0
    %931 = vmatpush.msra.mxu0 0.0
    %932 = vmatpush.msra.mxu0 0.0
    %933 = vmatmul.f32.gmra.mxu0 %v875
    %v934 = vpop.f32.mrf.mxu0
    %v935 = vadd.f32 0.0, %v934
    %936 = vdwg.mxu0
    %v937 = vadd.f32 %v185, %v895
    %v938 = vxor.u32 %v937, 2147483648
    %v939 = vmul.f32 %v938, 1.442695
    %v940 = vpow.pop %v939
    %v941 = vadd.f32 %v940, 1.0
    %v942 = vrcp.pop %v941
    %v943 = vmul.f32 %v941, %v942
    %v944 = vsub.f32 1.0, %v943
    %v945 = vmul.f32 %v942, %v944
    %v946 = vadd.f32 %v942, %v945
    %vm947 = vweird.f32 %v941
    %vm948 = vweird.f32 %v942
    %vm949 = vmor %vm947, %vm948
    %v950 = vsel %vm949, %v942, %v946
    %v951 = vand.u32 2147483647, %v941
    %vm952 = vcmp.eq.f32.partialorder %v951, 8.507059e+37
    %v953 = vand.u32 %v941, 2147483648
    %v954 = vor.u32 1.1754944e-38, %v953
    %v955 = vsel %vm952, %v954, %v950
    %v956 = vmul.f32 1.0, %v955
    %v957 = vadd.f32 %v895, %v265
    %959 = vrot.lane.b32.xlu0 %v957, 64
    %v960 = vpop.permute.xlu0 %959
    %v962 = vmul.f32 %v956, %v960
    %964 = vrot.lane.b32.xlu0 %v962, 64
    %v965 = vpop.permute.xlu0 %964
    %v967 = vadd.f32 %v185, %v965
    %v968 = vtanh.pop %v967
    %v969 = vsub.f32 1.0, %v956
    %971 = vrot.lane.b32.xlu0 %v968, 96
    %v972 = vpop.permute.xlu0 %971
    %v974 = vmul.f32 %v969, %v972
    %v975 = vrot.slane %v792, 6
    %v977 = vmul.f32 %v956, %v975
    %v978 = vadd.f32 %v974, %v977
    %v979 = vadd.f32 %v895, %v405
    %v980 = vadd.f32 %v915, %v405
    %982 = vrot.lane.b32.xlu0 %v915, 32
    %v983 = vpop.permute.xlu0 %982
    %v985 = vadd.f32 %v979, %v983
    %v986 = vxor.u32 %v985, 2147483648
    %v987 = vmul.f32 %v986, 1.442695
    %v988 = vpow.pop %v987
    %v989 = vadd.f32 %v988, 1.0
    %v990 = vrcp.pop %v989
    %v991 = vmul.f32 %v989, %v990
    %v992 = vsub.f32 1.0, %v991
    %v993 = vmul.f32 %v990, %v992
    %v994 = vadd.f32 %v990, %v993
    %vm995 = vweird.f32 %v989
    %vm996 = vweird.f32 %v990
    %vm997 = vmor %vm995, %vm996
    %v998 = vsel %vm997, %v990, %v994
    %v999 = vand.u32 2147483647, %v989
    %vm1000 = vcmp.eq.f32.partialorder %v999, 8.507059e+37
    %v1001 = vand.u32 %v989, 2147483648
    %v1002 = vor.u32 1.1754944e-38, %v1001
    %v1003 = vsel %vm1000, %v1002, %v998
    %v1004 = vmul.f32 1.0, %v1003
    %v1005 = vadd.f32 %v980, %v983
    %v1006 = vxor.u32 %v1005, 2147483648
    %v1007 = vmul.f32 %v1006, 1.442695
    %v1008 = vpow.pop %v1007
    %v1009 = vadd.f32 %v1008, 1.0
    %v1010 = vrcp.pop %v1009
    %v1011 = vmul.f32 %v1009, %v1010
    %v1012 = vsub.f32 1.0, %v1011
    %v1013 = vmul.f32 %v1010, %v1012
    %v1014 = vadd.f32 %v1010, %v1013
    %vm1015 = vweird.f32 %v1009
    %vm1016 = vweird.f32 %v1010
    %vm1017 = vmor %vm1015, %vm1016
    %v1018 = vsel %vm1017, %v1010, %v1014
    %v1019 = vand.u32 2147483647, %v1009
    %vm1020 = vcmp.eq.f32.partialorder %v1019, 8.507059e+37
    %v1021 = vand.u32 %v1009, 2147483648
    %v1022 = vor.u32 1.1754944e-38, %v1021
    %v1023 = vsel %vm1020, %v1022, %v1018
    %v1024 = vmul.f32 1.0, %v1023
    %v1025 = vadd.f32 %v935, %v456
    %1027 = vrot.lane.b32.xlu0 %v1025, 96
    %v1028 = vpop.permute.xlu0 %1027
    %v1030 = vmul.f32 %v1004, %v1028
    %1032 = vrot.lane.b32.xlu0 %v1030, 64
    %v1033 = vpop.permute.xlu0 %1032
    %v1035 = vadd.f32 %v980, %v1033
    %v1036 = vtanh.pop %v1035
    %v1037 = vsub.f32 1.0, %v1024
    %1039 = vrot.lane.b32.xlu0 %v1036, 96
    %v1040 = vpop.permute.xlu0 %1039
    %v1042 = vmul.f32 %v1037, %v1040
    %v1043 = vmul.f32 %v1024, %v858
    %v1044 = vadd.f32 %v1042, %v1043
    %v1046 = vrot.slane %v1044, 1
    %1048 = vst.msk [vmem:[#allocation11 + $0x3] sm:$0x1] %vm481, %v1044
    %1049 = vst.msk [vmem:[#allocation11 + $0xb] sm:$0x1] %vm481, %v1046
    %1051 = vrot.lane.b32.xlu0 %v978, 96
    %v1052 = vpop.permute.xlu0 %1051
    %1054 = vrot.lane.b32.xlu0 %v1044, 32
    %v1055 = vpop.permute.xlu0 %1054
    %v1057 = vsel %vm291, %v1052, %v1055
    %v1059 = vsel %vm119, %v1057, 0
    %1061 = vmatpush.msra.mxu0 0.0
    %1062 = vmatpush.msra.mxu0 0.0
    %1063 = vmatpush.msra.mxu0 0.0
    %1064 = vmatpush.msra.mxu0 0.0
    %1065 = vmatpush.msra.mxu0 0.0
    %1066 = vmatpush.msra.mxu0 0.0
    %1067 = vmatpush.msra.mxu0 0.0
    %1068 = vmatpush.msra.mxu0 0.0
    %1069 = vmatpush.msra.mxu0 0.0
    %1070 = vmatpush.msra.mxu0 0.0
    %1071 = vmatpush.msra.mxu0 0.0
    %1072 = vmatpush.msra.mxu0 0.0
    %1073 = vmatpush.msra.mxu0 %v215
    %1074 = vmatpush.msra.mxu0 %v214
    %1075 = vmatpush.msra.mxu0 %v213
    %1076 = vmatpush.msra.mxu0 %v212
    %1077 = vmatmul.f32.gmra.mxu0 %v1059
    %v1078 = vpop.f32.mrf.mxu0
    %v1079 = vadd.f32 0.0, %v1078
    %1080 = vdwg.mxu0
    %1081 = vmatpush.msra.mxu0 0.0
    %1082 = vmatpush.msra.mxu0 0.0
    %1083 = vmatpush.msra.mxu0 0.0
    %1084 = vmatpush.msra.mxu0 0.0
    %1085 = vmatpush.msra.mxu0 0.0
    %1086 = vmatpush.msra.mxu0 0.0
    %1087 = vmatpush.msra.mxu0 0.0
    %1088 = vmatpush.msra.mxu0 0.0
    %1089 = vmatpush.msra.mxu0 %v243
    %1090 = vmatpush.msra.mxu0 %v242
    %1091 = vmatpush.msra.mxu0 %v241
    %1092 = vmatpush.msra.mxu0 %v240
    %1093 = vmatpush.msra.mxu0 %v219
    %1094 = vmatpush.msra.mxu0 %v218
    %1095 = vmatpush.msra.mxu0 %v217
    %1096 = vmatpush.msra.mxu0 %v216
    %1097 = vmatmul.f32.gmra.mxu0 %v1059
    %v1098 = vpop.f32.mrf.mxu0
    %v1099 = vadd.f32 0.0, %v1098
    %1100 = vdwg.mxu0
    %1101 = vmatpush.msra.mxu0 0.0
    %1102 = vmatpush.msra.mxu0 0.0
    %1103 = vmatpush.msra.mxu0 0.0
    %1104 = vmatpush.msra.mxu0 0.0
    %1105 = vmatpush.msra.mxu0 0.0
    %1106 = vmatpush.msra.mxu0 0.0
    %1107 = vmatpush.msra.mxu0 0.0
    %1108 = vmatpush.msra.mxu0 0.0
    %1109 = vmatpush.msra.mxu0 %v235
    %1110 = vmatpush.msra.mxu0 %v233
    %1111 = vmatpush.msra.mxu0 %v231
    %1112 = vmatpush.msra.mxu0 %v229
    %1113 = vmatpush.msra.mxu0 0.0
    %1114 = vmatpush.msra.mxu0 0.0
    %1115 = vmatpush.msra.mxu0 0.0
    %1116 = vmatpush.msra.mxu0 0.0
    %1117 = vmatmul.f32.gmra.mxu0 %v1059
    %v1118 = vpop.f32.mrf.mxu0
    %v1119 = vadd.f32 0.0, %v1118
    %1120 = vdwg.mxu0
    %v1122 = vrot.slane %v1079, 6
    %v1124 = vadd.f32 %v185, %v1122
    %v1125 = vxor.u32 %v1124, 2147483648
    %v1126 = vmul.f32 %v1125, 1.442695
    %v1127 = vpow.pop %v1126
    %v1128 = vadd.f32 %v1127, 1.0
    %v1129 = vrcp.pop %v1128
    %v1130 = vmul.f32 %v1128, %v1129
    %v1131 = vsub.f32 1.0, %v1130
    %v1132 = vmul.f32 %v1129, %v1131
    %v1133 = vadd.f32 %v1129, %v1132
    %vm1134 = vweird.f32 %v1128
    %vm1135 = vweird.f32 %v1129
    %vm1136 = vmor %vm1134, %vm1135
    %v1137 = vsel %vm1136, %v1129, %v1133
    %v1138 = vand.u32 2147483647, %v1128
    %vm1139 = vcmp.eq.f32.partialorder %v1138, 8.507059e+37
    %v1140 = vand.u32 %v1128, 2147483648
    %v1141 = vor.u32 1.1754944e-38, %v1140
    %v1142 = vsel %vm1139, %v1141, %v1137
    %v1143 = vmul.f32 1.0, %v1142
    %v1144 = vadd.f32 %v1079, %v265
    %v1146 = vrot.slane %v1144, 6
    %1147 = vrot.lane.b32.xlu0 %v1146, 64
    %v1148 = vpop.permute.xlu0 %1147
    %v1150 = vmul.f32 %v1143, %v1148
    %1152 = vrot.lane.b32.xlu0 %v1150, 64
    %v1153 = vpop.permute.xlu0 %1152
    %v1155 = vadd.f32 %v185, %v1153
    %v1156 = vtanh.pop %v1155
    %v1157 = vsub.f32 1.0, %v1143
    %1159 = vrot.lane.b32.xlu0 %v1156, 96
    %v1160 = vpop.permute.xlu0 %1159
    %v1162 = vmul.f32 %v1157, %v1160
    %v1163 = vrot.slane %v978, 6
    %v1165 = vmul.f32 %v1143, %v1163
    %v1166 = vadd.f32 %v1162, %v1165
    %v1167 = vadd.f32 %v1079, %v405
    %v1168 = vadd.f32 %v1099, %v405
    %1170 = vrot.lane.b32.xlu0 %v1099, 32
    %v1171 = vpop.permute.xlu0 %1170
    %v1173 = vadd.f32 %v1167, %v1171
    %v1174 = vxor.u32 %v1173, 2147483648
    %v1175 = vmul.f32 %v1174, 1.442695
    %v1176 = vpow.pop %v1175
    %v1177 = vadd.f32 %v1176, 1.0
    %v1178 = vrcp.pop %v1177
    %v1179 = vmul.f32 %v1177, %v1178
    %v1180 = vsub.f32 1.0, %v1179
    %v1181 = vmul.f32 %v1178, %v1180
    %v1182 = vadd.f32 %v1178, %v1181
    %vm1183 = vweird.f32 %v1177
    %vm1184 = vweird.f32 %v1178
    %vm1185 = vmor %vm1183, %vm1184
    %v1186 = vsel %vm1185, %v1178, %v1182
    %v1187 = vand.u32 2147483647, %v1177
    %vm1188 = vcmp.eq.f32.partialorder %v1187, 8.507059e+37
    %v1189 = vand.u32 %v1177, 2147483648
    %v1190 = vor.u32 1.1754944e-38, %v1189
    %v1191 = vsel %vm1188, %v1190, %v1186
    %v1192 = vmul.f32 1.0, %v1191
    %v1193 = vadd.f32 %v1168, %v1171
    %v1194 = vxor.u32 %v1193, 2147483648
    %v1195 = vmul.f32 %v1194, 1.442695
    %v1196 = vpow.pop %v1195
    %v1197 = vadd.f32 %v1196, 1.0
    %v1198 = vrcp.pop %v1197
    %v1199 = vmul.f32 %v1197, %v1198
    %v1200 = vsub.f32 1.0, %v1199
    %v1201 = vmul.f32 %v1198, %v1200
    %v1202 = vadd.f32 %v1198, %v1201
    %vm1203 = vweird.f32 %v1197
    %vm1204 = vweird.f32 %v1198
    %vm1205 = vmor %vm1203, %vm1204
    %v1206 = vsel %vm1205, %v1198, %v1202
    %v1207 = vand.u32 2147483647, %v1197
    %vm1208 = vcmp.eq.f32.partialorder %v1207, 8.507059e+37
    %v1209 = vand.u32 %v1197, 2147483648
    %v1210 = vor.u32 1.1754944e-38, %v1209
    %v1211 = vsel %vm1208, %v1210, %v1206
    %v1212 = vmul.f32 1.0, %v1211
    %v1213 = vadd.f32 %v1119, %v456
    %1215 = vrot.lane.b32.xlu0 %v1213, 96
    %v1216 = vpop.permute.xlu0 %1215
    %v1218 = vmul.f32 %v1192, %v1216
    %1220 = vrot.lane.b32.xlu0 %v1218, 64
    %v1221 = vpop.permute.xlu0 %1220
    %v1223 = vadd.f32 %v1168, %v1221
    %v1224 = vtanh.pop %v1223
    %v1225 = vsub.f32 1.0, %v1212
    %1227 = vrot.lane.b32.xlu0 %v1224, 96
    %v1228 = vpop.permute.xlu0 %1227
    %v1230 = vmul.f32 %v1225, %v1228
    %v1231 = vmul.f32 %v1212, %v1044
    %v1232 = vadd.f32 %v1230, %v1231
    %v1234 = vrot.slane %v1232, 1
    %1236 = vst.msk [vmem:[#allocation11 + $0x4] sm:$0x1] %vm481, %v1232
    %1237 = vst.msk [vmem:[#allocation11 + $0xc] sm:$0x1] %vm481, %v1234
    %1239 = vrot.lane.b32.xlu0 %v1166, 96
    %v1240 = vpop.permute.xlu0 %1239
    %v1242 = vrot.slane %v1232, 6
    %1243 = vrot.lane.b32.xlu0 %v1242, 32
    %v1244 = vpop.permute.xlu0 %1243
    %v1246 = vsel %vm291, %v1240, %v1244
    %v1248 = vrot.slane %v1246, 2
    %v1249 = vsel %vm119, %v1248, 0
    %1251 = vmatpush.msra.mxu0 0.0
    %1252 = vmatpush.msra.mxu0 0.0
    %1253 = vmatpush.msra.mxu0 0.0
    %1254 = vmatpush.msra.mxu0 0.0
    %1255 = vmatpush.msra.mxu0 0.0
    %1256 = vmatpush.msra.mxu0 0.0
    %1257 = vmatpush.msra.mxu0 0.0
    %1258 = vmatpush.msra.mxu0 0.0
    %1259 = vmatpush.msra.mxu0 0.0
    %1260 = vmatpush.msra.mxu0 0.0
    %1261 = vmatpush.msra.mxu0 0.0
    %1262 = vmatpush.msra.mxu0 0.0
    %1263 = vmatpush.msra.mxu0 %v215
    %1264 = vmatpush.msra.mxu0 %v214
    %1265 = vmatpush.msra.mxu0 %v213
    %1266 = vmatpush.msra.mxu0 %v212
    %1267 = vmatmul.f32.gmra.mxu0 %v1249
    %v1268 = vpop.f32.mrf.mxu0
    %v1269 = vadd.f32 0.0, %v1268
    %1270 = vdwg.mxu0
    %1271 = vmatpush.msra.mxu0 0.0
    %1272 = vmatpush.msra.mxu0 0.0
    %1273 = vmatpush.msra.mxu0 0.0
    %1274 = vmatpush.msra.mxu0 0.0
    %1275 = vmatpush.msra.mxu0 0.0
    %1276 = vmatpush.msra.mxu0 0.0
    %1277 = vmatpush.msra.mxu0 0.0
    %1278 = vmatpush.msra.mxu0 0.0
    %1279 = vmatpush.msra.mxu0 %v243
    %1280 = vmatpush.msra.mxu0 %v242
    %1281 = vmatpush.msra.mxu0 %v241
    %1282 = vmatpush.msra.mxu0 %v240
    %1283 = vmatpush.msra.mxu0 %v219
    %1284 = vmatpush.msra.mxu0 %v218
    %1285 = vmatpush.msra.mxu0 %v217
    %1286 = vmatpush.msra.mxu0 %v216
    %1287 = vmatmul.f32.gmra.mxu0 %v1249
    %v1288 = vpop.f32.mrf.mxu0
    %v1289 = vadd.f32 0.0, %v1288
    %1290 = vdwg.mxu0
    %1291 = vmatpush.msra.mxu0 0.0
    %1292 = vmatpush.msra.mxu0 0.0
    %1293 = vmatpush.msra.mxu0 0.0
    %1294 = vmatpush.msra.mxu0 0.0
    %1295 = vmatpush.msra.mxu0 0.0
    %1296 = vmatpush.msra.mxu0 0.0
    %1297 = vmatpush.msra.mxu0 0.0
    %1298 = vmatpush.msra.mxu0 0.0
    %1299 = vmatpush.msra.mxu0 %v235
    %1300 = vmatpush.msra.mxu0 %v233
    %1301 = vmatpush.msra.mxu0 %v231
    %1302 = vmatpush.msra.mxu0 %v229
    %1303 = vmatpush.msra.mxu0 0.0
    %1304 = vmatpush.msra.mxu0 0.0
    %1305 = vmatpush.msra.mxu0 0.0
    %1306 = vmatpush.msra.mxu0 0.0
    %1307 = vmatmul.f32.gmra.mxu0 %v1249
    %v1308 = vpop.f32.mrf.mxu0
    %v1309 = vadd.f32 0.0, %v1308
    %1310 = vdwg.mxu0
    %v1312 = vrot.slane %v1269, 4
    %v1314 = vadd.f32 %v185, %v1312
    %v1315 = vxor.u32 %v1314, 2147483648
    %v1316 = vmul.f32 %v1315, 1.442695
    %v1317 = vpow.pop %v1316
    %v1318 = vadd.f32 %v1317, 1.0
    %v1319 = vrcp.pop %v1318
    %v1320 = vmul.f32 %v1318, %v1319
    %v1321 = vsub.f32 1.0, %v1320
    %v1322 = vmul.f32 %v1319, %v1321
    %v1323 = vadd.f32 %v1319, %v1322
    %vm1324 = vweird.f32 %v1318
    %vm1325 = vweird.f32 %v1319
    %vm1326 = vmor %vm1324, %vm1325
    %v1327 = vsel %vm1326, %v1319, %v1323
    %v1328 = vand.u32 2147483647, %v1318
    %vm1329 = vcmp.eq.f32.partialorder %v1328, 8.507059e+37
    %v1330 = vand.u32 %v1318, 2147483648
    %v1331 = vor.u32 1.1754944e-38, %v1330
    %v1332 = vsel %vm1329, %v1331, %v1327
    %v1333 = vmul.f32 1.0, %v1332
    %v1334 = vadd.f32 %v1269, %v265
    %v1336 = vrot.slane %v1334, 4
    %1337 = vrot.lane.b32.xlu0 %v1336, 64
    %v1338 = vpop.permute.xlu0 %1337
    %v1340 = vmul.f32 %v1333, %v1338
    %1342 = vrot.lane.b32.xlu0 %v1340, 64
    %v1343 = vpop.permute.xlu0 %1342
    %v1345 = vadd.f32 %v185, %v1343
    %v1346 = vtanh.pop %v1345
    %v1347 = vsub.f32 1.0, %v1333
    %1349 = vrot.lane.b32.xlu0 %v1346, 96
    %v1350 = vpop.permute.xlu0 %1349
    %v1352 = vmul.f32 %v1347, %v1350
    %v1353 = vrot.slane %v1166, 6
    %v1355 = vmul.f32 %v1333, %v1353
    %v1356 = vadd.f32 %v1352, %v1355
    %v1357 = vadd.f32 %v1269, %v405
    %v1358 = vadd.f32 %v1289, %v405
    %1360 = vrot.lane.b32.xlu0 %v1289, 32
    %v1361 = vpop.permute.xlu0 %1360
    %v1363 = vadd.f32 %v1357, %v1361
    %v1364 = vxor.u32 %v1363, 2147483648
    %v1365 = vmul.f32 %v1364, 1.442695
    %v1366 = vpow.pop %v1365
    %v1367 = vadd.f32 %v1366, 1.0
    %v1368 = vrcp.pop %v1367
    %v1369 = vmul.f32 %v1367, %v1368
    %v1370 = vsub.f32 1.0, %v1369
    %v1371 = vmul.f32 %v1368, %v1370
    %v1372 = vadd.f32 %v1368, %v1371
    %vm1373 = vweird.f32 %v1367
    %vm1374 = vweird.f32 %v1368
    %vm1375 = vmor %vm1373, %vm1374
    %v1376 = vsel %vm1375, %v1368, %v1372
    %v1377 = vand.u32 2147483647, %v1367
    %vm1378 = vcmp.eq.f32.partialorder %v1377, 8.507059e+37
    %v1379 = vand.u32 %v1367, 2147483648
    %v1380 = vor.u32 1.1754944e-38, %v1379
    %v1381 = vsel %vm1378, %v1380, %v1376
    %v1382 = vmul.f32 1.0, %v1381
    %v1383 = vadd.f32 %v1358, %v1361
    %v1384 = vxor.u32 %v1383, 2147483648
    %v1385 = vmul.f32 %v1384, 1.442695
    %v1386 = vpow.pop %v1385
    %v1387 = vadd.f32 %v1386, 1.0
    %v1388 = vrcp.pop %v1387
    %v1389 = vmul.f32 %v1387, %v1388
    %v1390 = vsub.f32 1.0, %v1389
    %v1391 = vmul.f32 %v1388, %v1390
    %v1392 = vadd.f32 %v1388, %v1391
    %vm1393 = vweird.f32 %v1387
    %vm1394 = vweird.f32 %v1388
    %vm1395 = vmor %vm1393, %vm1394
    %v1396 = vsel %vm1395, %v1388, %v1392
    %v1397 = vand.u32 2147483647, %v1387
    %vm1398 = vcmp.eq.f32.partialorder %v1397, 8.507059e+37
    %v1399 = vand.u32 %v1387, 2147483648
    %v1400 = vor.u32 1.1754944e-38, %v1399
    %v1401 = vsel %vm1398, %v1400, %v1396
    %v1402 = vmul.f32 1.0, %v1401
    %v1403 = vadd.f32 %v1309, %v456
    %1405 = vrot.lane.b32.xlu0 %v1403, 96
    %v1406 = vpop.permute.xlu0 %1405
    %v1408 = vmul.f32 %v1382, %v1406
    %1410 = vrot.lane.b32.xlu0 %v1408, 64
    %v1411 = vpop.permute.xlu0 %1410
    %v1413 = vadd.f32 %v1358, %v1411
    %v1414 = vtanh.pop %v1413
    %v1415 = vsub.f32 1.0, %v1402
    %1417 = vrot.lane.b32.xlu0 %v1414, 96
    %v1418 = vpop.permute.xlu0 %1417
    %v1420 = vmul.f32 %v1415, %v1418
    %v1421 = vmul.f32 %v1402, %v1232
    %v1422 = vadd.f32 %v1420, %v1421
    %v1424 = vrot.slane %v1422, 1
    %1426 = vst.msk [vmem:[#allocation11 + $0x5] sm:$0x1] %vm481, %v1422
    %1427 = vst.msk [vmem:[#allocation11 + $0xd] sm:$0x1] %vm481, %v1424
    %1429 = vrot.lane.b32.xlu0 %v1356, 96
    %v1430 = vpop.permute.xlu0 %1429
    %v1432 = vrot.slane %v1422, 4
    %1433 = vrot.lane.b32.xlu0 %v1432, 32
    %v1434 = vpop.permute.xlu0 %1433
    %v1436 = vsel %vm291, %v1430, %v1434
    %v1438 = vrot.slane %v1436, 4
    %v1439 = vsel %vm119, %v1438, 0
    %1441 = vmatpush.msra.mxu0 0.0
    %1442 = vmatpush.msra.mxu0 0.0
    %1443 = vmatpush.msra.mxu0 0.0
    %1444 = vmatpush.msra.mxu0 0.0
    %1445 = vmatpush.msra.mxu0 0.0
    %1446 = vmatpush.msra.mxu0 0.0
    %1447 = vmatpush.msra.mxu0 0.0
    %1448 = vmatpush.msra.mxu0 0.0
    %1449 = vmatpush.msra.mxu0 0.0
    %1450 = vmatpush.msra.mxu0 0.0
    %1451 = vmatpush.msra.mxu0 0.0
    %1452 = vmatpush.msra.mxu0 0.0
    %1453 = vmatpush.msra.mxu0 %v215
    %1454 = vmatpush.msra.mxu0 %v214
    %1455 = vmatpush.msra.mxu0 %v213
    %1456 = vmatpush.msra.mxu0 %v212
    %1457 = vmatmul.f32.gmra.mxu0 %v1439
    %v1458 = vpop.f32.mrf.mxu0
    %v1459 = vadd.f32 0.0, %v1458
    %1460 = vdwg.mxu0
    %1461 = vmatpush.msra.mxu0 0.0
    %1462 = vmatpush.msra.mxu0 0.0
    %1463 = vmatpush.msra.mxu0 0.0
    %1464 = vmatpush.msra.mxu0 0.0
    %1465 = vmatpush.msra.mxu0 0.0
    %1466 = vmatpush.msra.mxu0 0.0
    %1467 = vmatpush.msra.mxu0 0.0
    %1468 = vmatpush.msra.mxu0 0.0
    %1469 = vmatpush.msra.mxu0 %v243
    %1470 = vmatpush.msra.mxu0 %v242
    %1471 = vmatpush.msra.mxu0 %v241
    %1472 = vmatpush.msra.mxu0 %v240
    %1473 = vmatpush.msra.mxu0 %v219
    %1474 = vmatpush.msra.mxu0 %v218
    %1475 = vmatpush.msra.mxu0 %v217
    %1476 = vmatpush.msra.mxu0 %v216
    %1477 = vmatmul.f32.gmra.mxu0 %v1439
    %v1478 = vpop.f32.mrf.mxu0
    %v1479 = vadd.f32 0.0, %v1478
    %1480 = vdwg.mxu0
    %1481 = vmatpush.msra.mxu0 0.0
    %1482 = vmatpush.msra.mxu0 0.0
    %1483 = vmatpush.msra.mxu0 0.0
    %1484 = vmatpush.msra.mxu0 0.0
    %1485 = vmatpush.msra.mxu0 0.0
    %1486 = vmatpush.msra.mxu0 0.0
    %1487 = vmatpush.msra.mxu0 0.0
    %1488 = vmatpush.msra.mxu0 0.0
    %1489 = vmatpush.msra.mxu0 %v235
    %1490 = vmatpush.msra.mxu0 %v233
    %1491 = vmatpush.msra.mxu0 %v231
    %1492 = vmatpush.msra.mxu0 %v229
    %1493 = vmatpush.msra.mxu0 0.0
    %1494 = vmatpush.msra.mxu0 0.0
    %1495 = vmatpush.msra.mxu0 0.0
    %1496 = vmatpush.msra.mxu0 0.0
    %1497 = vmatmul.f32.gmra.mxu0 %v1439
    %v1498 = vpop.f32.mrf.mxu0
    %v1499 = vadd.f32 0.0, %v1498
    %1500 = vdwg.mxu0
    %v1502 = vrot.slane %v1459, 2
    %v1504 = vadd.f32 %v185, %v1502
    %v1505 = vxor.u32 %v1504, 2147483648
    %v1506 = vmul.f32 %v1505, 1.442695
    %v1507 = vpow.pop %v1506
    %v1508 = vadd.f32 %v1507, 1.0
    %v1509 = vrcp.pop %v1508
    %v1510 = vmul.f32 %v1508, %v1509
    %v1511 = vsub.f32 1.0, %v1510
    %v1512 = vmul.f32 %v1509, %v1511
    %v1513 = vadd.f32 %v1509, %v1512
    %vm1514 = vweird.f32 %v1508
    %vm1515 = vweird.f32 %v1509
    %vm1516 = vmor %vm1514, %vm1515
    %v1517 = vsel %vm1516, %v1509, %v1513
    %v1518 = vand.u32 2147483647, %v1508
    %vm1519 = vcmp.eq.f32.partialorder %v1518, 8.507059e+37
    %v1520 = vand.u32 %v1508, 2147483648
    %v1521 = vor.u32 1.1754944e-38, %v1520
    %v1522 = vsel %vm1519, %v1521, %v1517
    %v1523 = vmul.f32 1.0, %v1522
    %v1524 = vadd.f32 %v1459, %v265
    %v1526 = vrot.slane %v1524, 2
    %1527 = vrot.lane.b32.xlu0 %v1526, 64
    %v1528 = vpop.permute.xlu0 %1527
    %v1530 = vmul.f32 %v1523, %v1528
    %1532 = vrot.lane.b32.xlu0 %v1530, 64
    %v1533 = vpop.permute.xlu0 %1532
    %v1535 = vadd.f32 %v185, %v1533
    %v1536 = vtanh.pop %v1535
    %v1537 = vsub.f32 1.0, %v1523
    %1539 = vrot.lane.b32.xlu0 %v1536, 96
    %v1540 = vpop.permute.xlu0 %1539
    %v1542 = vmul.f32 %v1537, %v1540
    %v1543 = vrot.slane %v1356, 6
    %v1545 = vmul.f32 %v1523, %v1543
    %v1546 = vadd.f32 %v1542, %v1545
    %v1547 = vadd.f32 %v1459, %v405
    %v1548 = vadd.f32 %v1479, %v405
    %1550 = vrot.lane.b32.xlu0 %v1479, 32
    %v1551 = vpop.permute.xlu0 %1550
    %v1553 = vadd.f32 %v1547, %v1551
    %v1554 = vxor.u32 %v1553, 2147483648
    %v1555 = vmul.f32 %v1554, 1.442695
    %v1556 = vpow.pop %v1555
    %v1557 = vadd.f32 %v1556, 1.0
    %v1558 = vrcp.pop %v1557
    %v1559 = vmul.f32 %v1557, %v1558
    %v1560 = vsub.f32 1.0, %v1559
    %v1561 = vmul.f32 %v1558, %v1560
    %v1562 = vadd.f32 %v1558, %v1561
    %vm1563 = vweird.f32 %v1557
    %vm1564 = vweird.f32 %v1558
    %vm1565 = vmor %vm1563, %vm1564
    %v1566 = vsel %vm1565, %v1558, %v1562
    %v1567 = vand.u32 2147483647, %v1557
    %vm1568 = vcmp.eq.f32.partialorder %v1567, 8.507059e+37
    %v1569 = vand.u32 %v1557, 2147483648
    %v1570 = vor.u32 1.1754944e-38, %v1569
    %v1571 = vsel %vm1568, %v1570, %v1566
    %v1572 = vmul.f32 1.0, %v1571
    %v1573 = vadd.f32 %v1548, %v1551
    %v1574 = vxor.u32 %v1573, 2147483648
    %v1575 = vmul.f32 %v1574, 1.442695
    %v1576 = vpow.pop %v1575
    %v1577 = vadd.f32 %v1576, 1.0
    %v1578 = vrcp.pop %v1577
    %v1579 = vmul.f32 %v1577, %v1578
    %v1580 = vsub.f32 1.0, %v1579
    %v1581 = vmul.f32 %v1578, %v1580
    %v1582 = vadd.f32 %v1578, %v1581
    %vm1583 = vweird.f32 %v1577
    %vm1584 = vweird.f32 %v1578
    %vm1585 = vmor %vm1583, %vm1584
    %v1586 = vsel %vm1585, %v1578, %v1582
    %v1587 = vand.u32 2147483647, %v1577
    %vm1588 = vcmp.eq.f32.partialorder %v1587, 8.507059e+37
    %v1589 = vand.u32 %v1577, 2147483648
    %v1590 = vor.u32 1.1754944e-38, %v1589
    %v1591 = vsel %vm1588, %v1590, %v1586
    %v1592 = vmul.f32 1.0, %v1591
    %v1593 = vadd.f32 %v1499, %v456
    %1595 = vrot.lane.b32.xlu0 %v1593, 96
    %v1596 = vpop.permute.xlu0 %1595
    %v1598 = vmul.f32 %v1572, %v1596
    %1600 = vrot.lane.b32.xlu0 %v1598, 64
    %v1601 = vpop.permute.xlu0 %1600
    %v1603 = vadd.f32 %v1548, %v1601
    %v1604 = vtanh.pop %v1603
    %v1605 = vsub.f32 1.0, %v1592
    %1607 = vrot.lane.b32.xlu0 %v1604, 96
    %v1608 = vpop.permute.xlu0 %1607
    %v1610 = vmul.f32 %v1605, %v1608
    %v1611 = vmul.f32 %v1592, %v1422
    %v1612 = vadd.f32 %v1610, %v1611
    %v1614 = vrot.slane %v1612, 1
    %1616 = vst.msk [vmem:[#allocation11 + $0x6] sm:$0x1] %vm481, %v1612
    %1617 = vst.msk [vmem:[#allocation11 + $0xe] sm:$0x1] %vm481, %v1614
    %1619 = vrot.lane.b32.xlu0 %v1546, 96
    %v1620 = vpop.permute.xlu0 %1619
    %v1622 = vrot.slane %v1612, 2
    %1623 = vrot.lane.b32.xlu0 %v1622, 32
    %v1624 = vpop.permute.xlu0 %1623
    %v1626 = vsel %vm291, %v1620, %v1624
    %v1628 = vrot.slane %v1626, 6
    %v1629 = vsel %vm119, %v1628, 0
    %1631 = vmatpush.msra.mxu0 0.0
    %1632 = vmatpush.msra.mxu0 0.0
    %1633 = vmatpush.msra.mxu0 0.0
    %1634 = vmatpush.msra.mxu0 0.0
    %1635 = vmatpush.msra.mxu0 0.0
    %1636 = vmatpush.msra.mxu0 0.0
    %1637 = vmatpush.msra.mxu0 0.0
    %1638 = vmatpush.msra.mxu0 0.0
    %1639 = vmatpush.msra.mxu0 0.0
    %1640 = vmatpush.msra.mxu0 0.0
    %1641 = vmatpush.msra.mxu0 0.0
    %1642 = vmatpush.msra.mxu0 0.0
    %1643 = vmatpush.msra.mxu0 %v215
    %1644 = vmatpush.msra.mxu0 %v214
    %1645 = vmatpush.msra.mxu0 %v213
    %1646 = vmatpush.msra.mxu0 %v212
    %1647 = vmatmul.f32.gmra.mxu0 %v1629
    %v1648 = vpop.f32.mrf.mxu0
    %v1649 = vadd.f32 0.0, %v1648
    %1650 = vdwg.mxu0
    %1651 = vmatpush.msra.mxu0 0.0
    %1652 = vmatpush.msra.mxu0 0.0
    %1653 = vmatpush.msra.mxu0 0.0
    %1654 = vmatpush.msra.mxu0 0.0
    %1655 = vmatpush.msra.mxu0 0.0
    %1656 = vmatpush.msra.mxu0 0.0
    %1657 = vmatpush.msra.mxu0 0.0
    %1658 = vmatpush.msra.mxu0 0.0
    %1659 = vmatpush.msra.mxu0 %v243
    %1660 = vmatpush.msra.mxu0 %v242
    %1661 = vmatpush.msra.mxu0 %v241
    %1662 = vmatpush.msra.mxu0 %v240
    %1663 = vmatpush.msra.mxu0 %v219
    %1664 = vmatpush.msra.mxu0 %v218
    %1665 = vmatpush.msra.mxu0 %v217
    %1666 = vmatpush.msra.mxu0 %v216
    %1667 = vmatmul.f32.gmra.mxu0 %v1629
    %v1668 = vpop.f32.mrf.mxu0
    %v1669 = vadd.f32 0.0, %v1668
    %1670 = vdwg.mxu0
    %1671 = vmatpush.msra.mxu0 0.0
    %1672 = vmatpush.msra.mxu0 0.0
    %1673 = vmatpush.msra.mxu0 0.0
    %1674 = vmatpush.msra.mxu0 0.0
    %1675 = vmatpush.msra.mxu0 0.0
    %1676 = vmatpush.msra.mxu0 0.0
    %1677 = vmatpush.msra.mxu0 0.0
    %1678 = vmatpush.msra.mxu0 0.0
    %1679 = vmatpush.msra.mxu0 %v235
    %1680 = vmatpush.msra.mxu0 %v233
    %1681 = vmatpush.msra.mxu0 %v231
    %1682 = vmatpush.msra.mxu0 %v229
    %1683 = vmatpush.msra.mxu0 0.0
    %1684 = vmatpush.msra.mxu0 0.0
    %1685 = vmatpush.msra.mxu0 0.0
    %1686 = vmatpush.msra.mxu0 0.0
    %1687 = vmatmul.f32.gmra.mxu0 %v1629
    %v1688 = vpop.f32.mrf.mxu0
    %v1689 = vadd.f32 0.0, %v1688
    %1690 = vdwg.mxu0
    %v1691 = vadd.f32 %v1649, %v405
    %v1692 = vadd.f32 %v1669, %v405
    %1694 = vrot.lane.b32.xlu0 %v1669, 32
    %v1695 = vpop.permute.xlu0 %1694
    %v1697 = vadd.f32 %v1691, %v1695
    %v1698 = vxor.u32 %v1697, 2147483648
    %v1699 = vmul.f32 %v1698, 1.442695
    %v1700 = vpow.pop %v1699
    %v1701 = vadd.f32 %v1700, 1.0
    %v1702 = vrcp.pop %v1701
    %v1703 = vmul.f32 %v1701, %v1702
    %v1704 = vsub.f32 1.0, %v1703
    %v1705 = vmul.f32 %v1702, %v1704
    %v1706 = vadd.f32 %v1702, %v1705
    %vm1707 = vweird.f32 %v1701
    %vm1708 = vweird.f32 %v1702
    %vm1709 = vmor %vm1707, %vm1708
    %v1710 = vsel %vm1709, %v1702, %v1706
    %v1711 = vand.u32 2147483647, %v1701
    %vm1712 = vcmp.eq.f32.partialorder %v1711, 8.507059e+37
    %v1713 = vand.u32 %v1701, 2147483648
    %v1714 = vor.u32 1.1754944e-38, %v1713
    %v1715 = vsel %vm1712, %v1714, %v1710
    %v1716 = vmul.f32 1.0, %v1715
    %v1717 = vadd.f32 %v1692, %v1695
    %v1718 = vxor.u32 %v1717, 2147483648
    %v1719 = vmul.f32 %v1718, 1.442695
    %v1720 = vpow.pop %v1719
    %v1721 = vadd.f32 %v1720, 1.0
    %v1722 = vrcp.pop %v1721
    %v1723 = vmul.f32 %v1721, %v1722
    %v1724 = vsub.f32 1.0, %v1723
    %v1725 = vmul.f32 %v1722, %v1724
    %v1726 = vadd.f32 %v1722, %v1725
    %vm1727 = vweird.f32 %v1721
    %vm1728 = vweird.f32 %v1722
    %vm1729 = vmor %vm1727, %vm1728
    %v1730 = vsel %vm1729, %v1722, %v1726
    %v1731 = vand.u32 2147483647, %v1721
    %vm1732 = vcmp.eq.f32.partialorder %v1731, 8.507059e+37
    %v1733 = vand.u32 %v1721, 2147483648
    %v1734 = vor.u32 1.1754944e-38, %v1733
    %v1735 = vsel %vm1732, %v1734, %v1730
    %v1736 = vmul.f32 1.0, %v1735
    %v1737 = vadd.f32 %v1689, %v456
    %1739 = vrot.lane.b32.xlu0 %v1737, 96
    %v1740 = vpop.permute.xlu0 %1739
    %v1742 = vmul.f32 %v1716, %v1740
    %1744 = vrot.lane.b32.xlu0 %v1742, 64
    %v1745 = vpop.permute.xlu0 %1744
    %v1747 = vadd.f32 %v1692, %v1745
    %v1748 = vtanh.pop %v1747
    %v1749 = vsub.f32 1.0, %v1736
    %1751 = vrot.lane.b32.xlu0 %v1748, 96
    %v1752 = vpop.permute.xlu0 %1751
    %v1754 = vmul.f32 %v1749, %v1752
    %v1755 = vmul.f32 %v1736, %v1612
    %v1756 = vadd.f32 %v1754, %v1755
    %v1758 = vrot.slane %v1756, 1
    %1760 = vst.msk [vmem:[#allocation11 + $0x7] sm:$0x1] %vm481, %v1756
    %1761 = vst.msk [vmem:[#allocation11 + $0xf] sm:$0x1] %vm481, %v1758
    %vm1762 = vcmask 261126
    %1763 = vst.msk [vmem:[#allocation12 - $0x6] sm:$0xc0] %vm1762, %v1620
    %s1764 = scalar_lea.vmem [#allocation12], 2
    %vm1765 = vcmask 254976
    %1766 = vst.msk [vmem:[%s1764] sm:$0x3] %vm1765, %v1756
    // Predicated region
    $region58: #{tpu_custom_call.1} parent=1 // pred_check
      _
    $region59: #{tpu_custom_call.1} parent=1 // pred_check_branch
      %1768 = sbr.rel (0) target = $region61
    $region60: #{tpu_custom_call.1} parent=1 // pred_region
      %1770 = vsyncadd [#allocation4], 0
      %s1771 = sshll.u32 [#allocation11], 4
      %s1772 = int_to_ptr.vmem [resolvable:$true] %s1771
      %s1773 = sshll.u32 %s9, 4
      %s1774 = int_to_ptr.hbm [resolvable:$true] %s1773
      %1779 = dma.vmem_to_hbm [thread:$0]  %s1772, 256, %s1774, [#allocation4], 128, 128, 8
    $region61: #{tpu_custom_call.1} parent=1 // pred_fallthru
      _
    // Predicated region
    $region62: #{tpu_custom_call.1} parent=1 // pred_check
      _
    $region63: #{tpu_custom_call.1} parent=1 // pred_check_branch
      %1781 = sbr.rel (0) target = $region65
    $region64: #{tpu_custom_call.1} parent=1 // pred_region
      %1783 = vsyncadd [#allocation13], 0
      %s1784 = sshll.u32 [#allocation12], 4
      %s1785 = int_to_ptr.vmem [resolvable:$true] %s1784
      %s1786 = sshll.u32 %s10, 4
      %s1787 = int_to_ptr.hbm [resolvable:$true] %s1786
      %1792 = dma.vmem_to_hbm [thread:$0]  %s1785, 64, %s1787, [#allocation13], 32, 32, 2
    $region65: #{tpu_custom_call.1} parent=1 // pred_fallthru
      _
    // Predicated region
    $region66: #{tpu_custom_call.1} parent=1 // pred_check
      _
    $region67: #{tpu_custom_call.1} parent=1 // pred_check_branch
      %1794 = sbr.rel (0) target = $region69
    $region68: #{tpu_custom_call.1} parent=1 // pred_region
      %1796 = dma.done [#allocation4], 256
    $region69: #{tpu_custom_call.1} parent=1 // pred_fallthru
      _
    // Predicated region
    $region70: #{tpu_custom_call.1} parent=1 // pred_check
      _
    $region71: #{tpu_custom_call.1} parent=1 // pred_check_branch
      %1798 = sbr.rel (0) target = $region73
    $region72: #{tpu_custom_call.1} parent=1 // pred_region
      %1800 = dma.done [#allocation13], 64
    $region73: #{tpu_custom_call.1} parent=1 // pred_fallthru
      _
    %1801 = vsyncpa [#allocation3], 1
    %1802 = vsyncpa [#allocation6], 1
    %1803 = vsyncpa [#allocation9], 1
    %1804 = vsyncpa [#allocation4], 1
    %1805 = vsyncpa [#allocation13], 1

</llo_original>
